<compile_context>
chip_gen: v7x
topology: tpu7x:2x2x1
jax: 0.10.0
libtpu: 0.0.40
codegen_flags: <defaults>
</compile_context>

<pallas_src>
import functools

import jax
import jax.numpy as jnp
from jax.experimental import pallas as pl
from jax.experimental.pallas import tpu as pltpu


# ---------------------------------------------------------------------------
# Shapes implied by Embedding1D
# ---------------------------------------------------------------------------
K = 27                 # conv kernel size
L_IN = 150             # input signal length (so that 16 * 18 == 288)
L1 = L_IN - K + 1      # 124  conv1 output length
P1 = L1 // 2           # 62   pool1 output length
L2 = P1 - K + 1        # 36   conv2 output length
P2 = L2 // 2           # 18   pool2 output length
C1, C2 = 6, 16         # conv channel counts
FLAT = C2 * P2         # 288  flattened feature size
HID = 128              # fc1 width
PADW = 384             # lane-aligned width each pooled half is padded to
                       # round_up(C1*P1=372, 128) == round_up(C2*P2=288, 128) == 384


def _round_up(n, m):
    return (n + m - 1) // m * m


# ---------------------------------------------------------------------------
# Fused forward kernel: conv1+pool1+conv2+pool2+fc1+fc2 on one batch tile
# ---------------------------------------------------------------------------
def _embedding1d_kernel(alpha_ref,                   # SMEM (3,) PReLU slopes
                        x_ref,                       # (TB, L_IN) f32
                        w1_ref, b1_ref,              # conv1 fused Toeplitz + bias
                        w2_ref, b2_ref,              # conv2 fused Toeplitz + bias
                        wf1_ref, bf1_ref,            # fc1 (rows zero-padded to PADW)
                        wf2_ref, bf2_ref,            # fc2
                        o_ref):                      # (TB, latent) f32
    cd = w1_ref.dtype                                # MXU compute dtype (bf16)
    a1 = alpha_ref[0]
    a2 = alpha_ref[1]
    a3 = alpha_ref[2]

    def prelu(y, a):
        return jnp.where(y >= 0.0, y, a * y)

    # f32 -> bf16 cast in-kernel: VPU work hidden under MXU slack, and the
    # wrapper never materializes a converted copy of the activations in HBM.
    x = x_ref[...].astype(cd)                                          # (TB, 150)

    # conv1 + bias + PReLU fused with MaxPool1d(2,2): a single Toeplitz matmul
    # whose columns are [even pooled positions | odd pooled positions], each
    # half zero-padded to PADW lanes.  The split at column 384 is a static,
    # vreg-lane-aligned slice; max(PReLU(even), PReLU(odd)) keeps torch's
    # Conv -> PReLU -> MaxPool order exactly.
    y = jnp.dot(x, w1_ref[...], preferred_element_type=jnp.float32) + b1_ref[...]
    p1 = jnp.maximum(prelu(y[:, :PADW], a1), prelu(y[:, PADW:], a1)).astype(cd)

    # conv2 + bias + PReLU + pool, same trick.  p1 stays channels-major (c, l)
    # -- exactly torch's x.view(B, -1) order -- so fc1 needs no permutation.
    y = jnp.dot(p1, w2_ref[...], preferred_element_type=jnp.float32) + b2_ref[...]
    p2 = jnp.maximum(prelu(y[:, :PADW], a2), prelu(y[:, PADW:], a2)).astype(cd)

    # fc1 + PReLU + fc2 — the (TB, 128) intermediate never leaves VMEM.
    h = prelu(jnp.dot(p2, wf1_ref[...], preferred_element_type=jnp.float32)
              + bf1_ref[...], a3).astype(cd)
    z = jnp.dot(h, wf2_ref[...], preferred_element_type=jnp.float32) + bf2_ref[...]
    o_ref[...] = z.astype(o_ref.dtype)


# ---------------------------------------------------------------------------
# Host-side (tiny, weight-sized) preparation: conv -> Toeplitz matrix
# ---------------------------------------------------------------------------
def _conv1d_toeplitz(w, l_in):
    """w: (OC, C, K) torch Conv1d weight.  Returns T of shape (C*l_in, OC*l_out)
    such that for x_flat[c*l_in + i] = x[c, i]:
        (x_flat @ T)[oc*l_out + l] == conv1d(x, w)[oc, l]   (valid, stride 1).
    """
    oc, c, k = w.shape
    l_out = l_in - k + 1
    i = jnp.arange(l_in)[:, None]                  # (l_in, 1)
    l = jnp.arange(l_out)[None, :]                 # (1, l_out)
    d = i - l                                      # tap index
    valid = (d >= 0) & (d < k)
    dcl = jnp.clip(d, 0, k - 1)
    wt = jnp.transpose(w, (1, 2, 0))               # (C, K, OC)
    t = wt[:, dcl, :] * valid[None, :, :, None].astype(w.dtype)   # (C, l_in, l_out, OC)
    t = jnp.transpose(t, (0, 1, 3, 2))             # (C, l_in, OC, l_out)
    return t.reshape(c * l_in, oc * l_out)


def _prepare_weights(params, cd):
    """O(weights) host-side prep: Toeplitz + even/odd fusion + lane padding."""
    f32 = jnp.float32

    def pad_cols(m, n):
        return jnp.pad(m, ((0, 0), (0, n - m.shape[1])))

    def pad_rows(m, n):
        return jnp.pad(m, ((0, n - m.shape[0]), (0, 0)))

    # conv1: even/odd pooled columns padded to PADW and concatenated -> one
    # (150, 2*PADW) matmul operand.  L1=124 is even per channel, so the global
    # stride-2 column slicing is exactly the per-channel even/odd split.
    t1 = _conv1d_toeplitz(params["conv1_w"].astype(f32), L_IN)          # (150, C1*L1)
    w1 = jnp.concatenate([pad_cols(t1[:, 0::2], PADW),
                          pad_cols(t1[:, 1::2], PADW)], axis=1).astype(cd)
    b1h = jnp.pad(jnp.repeat(params["conv1_b"].astype(f32), P1), (0, PADW - C1 * P1))
    b1 = jnp.concatenate([b1h, b1h])[None, :]                            # (1, 2*PADW)

    # conv2: its input p1 is (.., PADW) with a zero tail, so pad the Toeplitz
    # ROWS 372 -> 384 with zeros (keeps the padded p1 columns inert).
    t2 = _conv1d_toeplitz(params["conv2_w"].astype(f32), P1)             # (C1*P1, C2*L2)
    t2 = pad_rows(t2, PADW)
    w2 = jnp.concatenate([pad_cols(t2[:, 0::2], PADW),
                          pad_cols(t2[:, 1::2], PADW)], axis=1).astype(cd)
    b2h = jnp.pad(jnp.repeat(params["conv2_b"].astype(f32), P2), (0, PADW - FLAT))
    b2 = jnp.concatenate([b2h, b2h])[None, :]                            # (1, 2*PADW)

    # fc1 consumes the zero-padded (.., PADW) flattened features: pad its rows.
    wf1 = pad_rows(params["fc1_w"].astype(f32).T, PADW).astype(cd)       # (PADW, HID)
    bf1 = params["fc1_b"].astype(f32)[None, :]                           # (1, HID)
    wf2 = params["fc2_w"].astype(cd).T                                   # (HID, latent)
    bf2 = params["fc2_b"].astype(f32)[None, :]                           # (1, latent)

    alphas = jnp.stack([params["prelu1_a"], params["prelu2_a"],
                        params["prelu3_a"]]).astype(f32)                 # (3,)
    return alphas, w1, b1, w2, b2, wf1, bf1, wf2, bf2


# ---------------------------------------------------------------------------
# Batch tiling policy
# ---------------------------------------------------------------------------
def _choose_batch_tile(B, tile_b):
    B = max(int(B), 1)
    tb = min(_round_up(tile_b, 16), _round_up(B, 16))   # 16: bf16 sublane packing
    if tb >= 128:
        tb = (tb // 128) * 128                          # keep MXU M dim fully fed
    # v7x has two TensorCores sharing the "parallel" batch axis: if the whole
    # batch would fit in a single grid step and is large enough to split, use
    # two tiles so neither core idles.  On single-TC v5e/v6e the extra grid
    # step costs ~0.35 us — noise.
    if B >= 256 and _round_up(B, tb) == tb:
        tb = _round_up((B + 1) // 2, 16)
        if tb >= 128:
            tb = _round_up(tb, 128)
    return tb


# ---------------------------------------------------------------------------
# Forward pass
# ---------------------------------------------------------------------------
@functools.partial(jax.jit, static_argnames=("tile_b", "compute_dtype"))
def embedding1d_forward(x, params, *, tile_b=512, compute_dtype=jnp.bfloat16):
    """x: (B, 1, 150) f32 -> (B, latent_dims) f32.  Matches Embedding1D.forward.

    tile_b: batch rows per grid step (512 default; 1024 is fine for large B).
    """
    B = x.shape[0]
    latent = params["fc2_w"].shape[0]

    alphas, w1, b1, w2, b2, wf1, bf1, wf2, bf2 = _prepare_weights(params, compute_dtype)

    tb = _choose_batch_tile(B, tile_b)
    bp = _round_up(B, tb)
    xf = x.reshape(B, L_IN)                      # metadata-only; stays f32 in HBM
    if bp != B:
        xf = jnp.pad(xf, ((0, bp - B), (0, 0)))
    grid = (bp // tb,)

    def resident(shape):                         # weight stays in VMEM across the grid
        return pl.BlockSpec(shape, lambda i: (0,) * len(shape))

    z = pl.pallas_call(
        _embedding1d_kernel,
        out_shape=jax.ShapeDtypeStruct((bp, latent), jnp.float32),
        grid=grid,
        in_specs=[
            pl.BlockSpec(memory_space=pltpu.MemorySpace.SMEM),   # PReLU slopes
            pl.BlockSpec((tb, L_IN), lambda i: (i, 0)),          # f32 x tile
            resident(w1.shape), resident(b1.shape),
            resident(w2.shape), resident(b2.shape),
            resident(wf1.shape), resident(bf1.shape),
            resident(wf2.shape), resident(bf2.shape),
        ],
        out_specs=pl.BlockSpec((tb, latent), lambda i: (i, 0)),
        compiler_params=pltpu.CompilerParams(
            dimension_semantics=("parallel",)),
    )(alphas, xf, w1, b1, w2, b2, wf1, bf1, wf2, bf2)

    return z[:B]


# ---------------------------------------------------------------------------
# Parameter init (PyTorch layouts / defaults)
# ---------------------------------------------------------------------------
def init_params(key, latent_dims=2):
    ks = jax.random.split(key, 8)

    def u(k, shape, fan_in):
        bound = 1.0 / jnp.sqrt(jnp.float32(fan_in))
        return jax.random.uniform(k, shape, jnp.float32, -bound, bound)

    return {
        # torch Conv1d weight layout (OC, C, K)
        "conv1_w": u(ks[0], (C1, 1, K), 1 * K),
        "conv1_b": u(ks[1], (C1,), 1 * K),
        "prelu1_a": jnp.float32(0.25),            # nn.PReLU() default single slope
        "conv2_w": u(ks[2], (C2, C1, K), C1 * K),
        "conv2_b": u(ks[3], (C2,), C1 * K),
        "prelu2_a": jnp.float32(0.25),
        # torch Linear weight layout (out, in)
        "fc1_w": u(ks[4], (HID, FLAT), FLAT),
        "fc1_b": u(ks[5], (HID,), FLAT),
        "prelu3_a": jnp.float32(0.25),
        "fc2_w": u(ks[6], (latent_dims, HID), HID),
        "fc2_b": u(ks[7], (latent_dims,), HID),
    }


if __name__ == "__main__":
    key = jax.random.PRNGKey(0)
    k_x, k_p = jax.random.split(key)

    latent_dims = 2
    batch = 2
    # input length 150: 150 -conv27-> 124 -pool2-> 62 -conv27-> 36 -pool2-> 18; 16*18 = 288
    x = jax.random.normal(k_x, (batch, 1, L_IN), jnp.float32)
    params = init_params(k_p, latent_dims)

    z = embedding1d_forward(x, params)
    jax.block_until_ready(z)
    assert z.shape == (batch, latent_dims), z.shape
    assert bool(jnp.all(jnp.isfinite(z)))
    print("KERNEL_OK")
</pallas_src>

<mosaic_0001>
module attributes {stable_mosaic.version = 11 : i64} {
  func.func @_embedding1d_kernel(%arg0: i32, %arg1: memref<3xf32, #tpu.memory_space<smem>>, %arg2: memref<16x150xf32, #tpu.memory_space<vmem>>, %arg3: memref<150x768xbf16, #tpu.memory_space<vmem>>, %arg4: memref<1x768xf32, #tpu.memory_space<vmem>>, %arg5: memref<384x768xbf16, #tpu.memory_space<vmem>>, %arg6: memref<1x768xf32, #tpu.memory_space<vmem>>, %arg7: memref<384x128xbf16, #tpu.memory_space<vmem>>, %arg8: memref<1x128xf32, #tpu.memory_space<vmem>>, %arg9: memref<128x2xbf16, #tpu.memory_space<vmem>>, %arg10: memref<1x2xf32, #tpu.memory_space<vmem>>, %arg11: memref<16x2xf32, #tpu.memory_space<vmem>>) attributes {dimension_semantics = [#tpu.dimension_semantics<parallel>], iteration_bounds = array<i64: 1>, scalar_prefetch = 0 : i64, scratch_operands = 0 : i64, tpu.core_type = #tpu.core_type<tc>, window_params = [{transform_indices = @transform_0, window_bounds = array<i64: 3>}, {transform_indices = @transform_1, window_bounds = array<i64: 16, 150>}, {pipeline_mode = #tpu.pipeline_mode<synchronous>, transform_indices = @transform_2, window_bounds = array<i64: 150, 768>}, {pipeline_mode = #tpu.pipeline_mode<synchronous>, transform_indices = @transform_3, window_bounds = array<i64: 1, 768>}, {pipeline_mode = #tpu.pipeline_mode<synchronous>, transform_indices = @transform_4, window_bounds = array<i64: 384, 768>}, {pipeline_mode = #tpu.pipeline_mode<synchronous>, transform_indices = @transform_5, window_bounds = array<i64: 1, 768>}, {pipeline_mode = #tpu.pipeline_mode<synchronous>, transform_indices = @transform_6, window_bounds = array<i64: 384, 128>}, {pipeline_mode = #tpu.pipeline_mode<synchronous>, transform_indices = @transform_7, window_bounds = array<i64: 1, 128>}, {pipeline_mode = #tpu.pipeline_mode<synchronous>, transform_indices = @transform_8, window_bounds = array<i64: 128, 2>}, {pipeline_mode = #tpu.pipeline_mode<synchronous>, transform_indices = @transform_9, window_bounds = array<i64: 1, 2>}, {transform_indices = @transform_10, window_bounds = array<i64: 16, 2>}]} {
    %c0 = arith.constant 0 : index
    %0 = memref.load %arg1[%c0] : memref<3xf32, #tpu.memory_space<smem>>
    %c1 = arith.constant 1 : index
    %1 = memref.load %arg1[%c1] : memref<3xf32, #tpu.memory_space<smem>>
    %c2 = arith.constant 2 : index
    %2 = memref.load %arg1[%c2] : memref<3xf32, #tpu.memory_space<smem>>
    %c0_0 = arith.constant 0 : index
    %c0_1 = arith.constant 0 : index
    %3 = vector.load %arg2[%c0_0, %c0_1] : memref<16x150xf32, #tpu.memory_space<vmem>>, vector<16x150xf32>
    %4 = arith.truncf %3 : vector<16x150xf32> to vector<16x150xbf16>
    %c0_2 = arith.constant 0 : index
    %c0_3 = arith.constant 0 : index
    %5 = vector.load %arg3[%c0_2, %c0_3] : memref<150x768xbf16, #tpu.memory_space<vmem>>, vector<150x768xbf16>
    %cst = arith.constant dense<0.000000e+00> : vector<16x768xf32>
    %6 = tpu.matmul %4, %5, %cst {dimension_numbers = #tpu.dot_dimension_numbers<[1], [0], [0], [1], [0, 0, 1, 1], [], []>} : vector<16x150xbf16>, vector<150x768xbf16>, vector<16x768xf32> -> vector<16x768xf32>
    %c0_4 = arith.constant 0 : index
    %c0_5 = arith.constant 0 : index
    %7 = vector.load %arg4[%c0_4, %c0_5] : memref<1x768xf32, #tpu.memory_space<vmem>>, vector<1x768xf32>
    %8 = vector.broadcast %7 : vector<1x768xf32> to vector<16x768xf32>
    %9 = arith.addf %6, %8 : vector<16x768xf32>
    %10 = vector.extract_strided_slice %9 {offsets = [0, 0], sizes = [16, 384], strides = [1, 1]} : vector<16x768xf32> to vector<16x384xf32>
    %cst_6 = arith.constant 0.000000e+00 : f32
    %11 = vector.broadcast %cst_6 : f32 to vector<16x384xf32>
    %12 = arith.cmpf oge, %10, %11 : vector<16x384xf32>
    %13 = vector.broadcast %0 : f32 to vector<16x384xf32>
    %14 = arith.mulf %13, %10 : vector<16x384xf32>
    %15 = arith.select %12, %10, %14 : vector<16x384xi1>, vector<16x384xf32>
    %16 = vector.extract_strided_slice %9 {offsets = [0, 384], sizes = [16, 384], strides = [1, 1]} : vector<16x768xf32> to vector<16x384xf32>
    %cst_7 = arith.constant 0.000000e+00 : f32
    %17 = vector.broadcast %cst_7 : f32 to vector<16x384xf32>
    %18 = arith.cmpf oge, %16, %17 : vector<16x384xf32>
    %19 = vector.broadcast %0 : f32 to vector<16x384xf32>
    %20 = arith.mulf %19, %16 : vector<16x384xf32>
    %21 = arith.select %18, %16, %20 : vector<16x384xi1>, vector<16x384xf32>
    %22 = arith.maximumf %15, %21 : vector<16x384xf32>
    %23 = arith.truncf %22 : vector<16x384xf32> to vector<16x384xbf16>
    %c0_8 = arith.constant 0 : index
    %c0_9 = arith.constant 0 : index
    %24 = vector.load %arg5[%c0_8, %c0_9] : memref<384x768xbf16, #tpu.memory_space<vmem>>, vector<384x768xbf16>
    %cst_10 = arith.constant dense<0.000000e+00> : vector<16x768xf32>
    %25 = tpu.matmul %23, %24, %cst_10 {dimension_numbers = #tpu.dot_dimension_numbers<[1], [0], [0], [1], [0, 0, 1, 1], [], []>} : vector<16x384xbf16>, vector<384x768xbf16>, vector<16x768xf32> -> vector<16x768xf32>
    %c0_11 = arith.constant 0 : index
    %c0_12 = arith.constant 0 : index
    %26 = vector.load %arg6[%c0_11, %c0_12] : memref<1x768xf32, #tpu.memory_space<vmem>>, vector<1x768xf32>
    %27 = vector.broadcast %26 : vector<1x768xf32> to vector<16x768xf32>
    %28 = arith.addf %25, %27 : vector<16x768xf32>
    %29 = vector.extract_strided_slice %28 {offsets = [0, 0], sizes = [16, 384], strides = [1, 1]} : vector<16x768xf32> to vector<16x384xf32>
    %cst_13 = arith.constant 0.000000e+00 : f32
    %30 = vector.broadcast %cst_13 : f32 to vector<16x384xf32>
    %31 = arith.cmpf oge, %29, %30 : vector<16x384xf32>
    %32 = vector.broadcast %1 : f32 to vector<16x384xf32>
    %33 = arith.mulf %32, %29 : vector<16x384xf32>
    %34 = arith.select %31, %29, %33 : vector<16x384xi1>, vector<16x384xf32>
    %35 = vector.extract_strided_slice %28 {offsets = [0, 384], sizes = [16, 384], strides = [1, 1]} : vector<16x768xf32> to vector<16x384xf32>
    %cst_14 = arith.constant 0.000000e+00 : f32
    %36 = vector.broadcast %cst_14 : f32 to vector<16x384xf32>
    %37 = arith.cmpf oge, %35, %36 : vector<16x384xf32>
    %38 = vector.broadcast %1 : f32 to vector<16x384xf32>
    %39 = arith.mulf %38, %35 : vector<16x384xf32>
    %40 = arith.select %37, %35, %39 : vector<16x384xi1>, vector<16x384xf32>
    %41 = arith.maximumf %34, %40 : vector<16x384xf32>
    %42 = arith.truncf %41 : vector<16x384xf32> to vector<16x384xbf16>
    %c0_15 = arith.constant 0 : index
    %c0_16 = arith.constant 0 : index
    %43 = vector.load %arg7[%c0_15, %c0_16] : memref<384x128xbf16, #tpu.memory_space<vmem>>, vector<384x128xbf16>
    %cst_17 = arith.constant dense<0.000000e+00> : vector<16x128xf32>
    %44 = tpu.matmul %42, %43, %cst_17 {dimension_numbers = #tpu.dot_dimension_numbers<[1], [0], [0], [1], [0, 0, 1, 1], [], []>} : vector<16x384xbf16>, vector<384x128xbf16>, vector<16x128xf32> -> vector<16x128xf32>
    %c0_18 = arith.constant 0 : index
    %c0_19 = arith.constant 0 : index
    %45 = vector.load %arg8[%c0_18, %c0_19] : memref<1x128xf32, #tpu.memory_space<vmem>>, vector<1x128xf32>
    %46 = vector.broadcast %45 : vector<1x128xf32> to vector<16x128xf32>
    %47 = arith.addf %44, %46 : vector<16x128xf32>
    %cst_20 = arith.constant 0.000000e+00 : f32
    %48 = vector.broadcast %cst_20 : f32 to vector<16x128xf32>
    %49 = arith.cmpf oge, %47, %48 : vector<16x128xf32>
    %50 = vector.broadcast %2 : f32 to vector<16x128xf32>
    %51 = arith.mulf %50, %47 : vector<16x128xf32>
    %52 = arith.select %49, %47, %51 : vector<16x128xi1>, vector<16x128xf32>
    %53 = arith.truncf %52 : vector<16x128xf32> to vector<16x128xbf16>
    %c0_21 = arith.constant 0 : index
    %c0_22 = arith.constant 0 : index
    %54 = vector.load %arg9[%c0_21, %c0_22] : memref<128x2xbf16, #tpu.memory_space<vmem>>, vector<128x2xbf16>
    %cst_23 = arith.constant dense<0.000000e+00> : vector<16x2xf32>
    %55 = tpu.matmul %53, %54, %cst_23 {dimension_numbers = #tpu.dot_dimension_numbers<[1], [0], [0], [1], [0, 0, 1, 1], [], []>} : vector<16x128xbf16>, vector<128x2xbf16>, vector<16x2xf32> -> vector<16x2xf32>
    %c0_24 = arith.constant 0 : index
    %c0_25 = arith.constant 0 : index
    %56 = vector.load %arg10[%c0_24, %c0_25] : memref<1x2xf32, #tpu.memory_space<vmem>>, vector<1x2xf32>
    %57 = vector.broadcast %56 : vector<1x2xf32> to vector<16x2xf32>
    %58 = arith.addf %55, %57 : vector<16x2xf32>
    %c0_26 = arith.constant 0 : index
    %c0_27 = arith.constant 0 : index
    %59 = vector.load %arg11[%c0_26, %c0_27] : memref<16x2xf32, #tpu.memory_space<vmem>>, vector<16x2xf32>
    tpu.vector_store %arg11[%c0_26, %c0_27], %58 {strides = array<i32>} : memref<16x2xf32, #tpu.memory_space<vmem>>, vector<16x2xf32>,
    return
  }
  func.func @transform_0(%arg0: i32) -> i32 {
    %c0_i32 = arith.constant 0 : i32
    %c0_i32_0 = arith.constant 0 : i32
    return %c0_i32 : i32
  }
  func.func @transform_1(%arg0: i32) -> (i32, i32) {
    %c0_i32 = arith.constant 0 : i32
    %c0_i32_0 = arith.constant 0 : i32
    return %arg0, %c0_i32 : i32, i32
  }
  func.func @transform_2(%arg0: i32) -> (i32, i32) {
    %c0_i32 = arith.constant 0 : i32
    %c0_i32_0 = arith.constant 0 : i32
    %c0_i32_1 = arith.constant 0 : i32
    return %c0_i32, %c0_i32_0 : i32, i32
  }
  func.func @transform_3(%arg0: i32) -> (i32, i32) {
    %c0_i32 = arith.constant 0 : i32
    %c0_i32_0 = arith.constant 0 : i32
    %c0_i32_1 = arith.constant 0 : i32
    return %c0_i32, %c0_i32_0 : i32, i32
  }
  func.func @transform_4(%arg0: i32) -> (i32, i32) {
    %c0_i32 = arith.constant 0 : i32
    %c0_i32_0 = arith.constant 0 : i32
    %c0_i32_1 = arith.constant 0 : i32
    return %c0_i32, %c0_i32_0 : i32, i32
  }
  func.func @transform_5(%arg0: i32) -> (i32, i32) {
    %c0_i32 = arith.constant 0 : i32
    %c0_i32_0 = arith.constant 0 : i32
    %c0_i32_1 = arith.constant 0 : i32
    return %c0_i32, %c0_i32_0 : i32, i32
  }
  func.func @transform_6(%arg0: i32) -> (i32, i32) {
    %c0_i32 = arith.constant 0 : i32
    %c0_i32_0 = arith.constant 0 : i32
    %c0_i32_1 = arith.constant 0 : i32
    return %c0_i32, %c0_i32_0 : i32, i32
  }
  func.func @transform_7(%arg0: i32) -> (i32, i32) {
    %c0_i32 = arith.constant 0 : i32
    %c0_i32_0 = arith.constant 0 : i32
    %c0_i32_1 = arith.constant 0 : i32
    return %c0_i32, %c0_i32_0 : i32, i32
  }
  func.func @transform_8(%arg0: i32) -> (i32, i32) {
    %c0_i32 = arith.constant 0 : i32
    %c0_i32_0 = arith.constant 0 : i32
    %c0_i32_1 = arith.constant 0 : i32
    return %c0_i32, %c0_i32_0 : i32, i32
  }
  func.func @transform_9(%arg0: i32) -> (i32, i32) {
    %c0_i32 = arith.constant 0 : i32
    %c0_i32_0 = arith.constant 0 : i32
    %c0_i32_1 = arith.constant 0 : i32
    return %c0_i32, %c0_i32_0 : i32, i32
  }
  func.func @transform_10(%arg0: i32) -> (i32, i32) {
    %c0_i32 = arith.constant 0 : i32
    %c0_i32_0 = arith.constant 0 : i32
    return %arg0, %c0_i32 : i32, i32
  }
}

</mosaic_0001>

<llo_original>
// kernel: embedding1d_forward.1
$region0: #{embedding1d_forward.1}
  #allocation0 [shape = 'u32[]', space=smem, size = 0x4, offset = 0x4, fixed_abs, tag = 'smem constant byte address 0x4 - core index']
  #allocation1 [shape = 'u32[144,128]{1,0:T(1,128)}', space=vmem, size = 0x12000, scoped, tag = 'internal scratch']
  %s0 = inlined_call_operand.vmem [shape: f32[3], index: 0, kind: input, shape index: {}]
  %s1 = inlined_call_operand.vmem [shape: f32[16,150], index: 1, kind: input, shape index: {}]
  %s2 = inlined_call_operand.vmem [shape: bf16[150,768], index: 2, kind: input, shape index: {}]
  %s3 = inlined_call_operand.vmem [shape: f32[1,768], index: 3, kind: input, shape index: {}]
  %s4 = inlined_call_operand.vmem [shape: bf16[384,768], index: 4, kind: input, shape index: {}]
  %s5 = inlined_call_operand.vmem [shape: f32[1,768], index: 5, kind: input, shape index: {}]
  %s6 = inlined_call_operand.vmem [shape: bf16[384,128], index: 6, kind: input, shape index: {}]
  %s7 = inlined_call_operand.vmem [shape: f32[1,128], index: 7, kind: input, shape index: {}]
  %s8 = inlined_call_operand.vmem [shape: bf16[128,2], index: 8, kind: input, shape index: {}]
  %s9 = inlined_call_operand.vmem [shape: f32[1,2], index: 9, kind: input, shape index: {}]
  %s10 = inlined_call_operand.vmem [shape: f32[16,2], index: 10, kind: output, shape index: {}]
  %s11 = sld [smem:[#allocation0]]
  $region54: #{embedding1d_forward.1} parent=0
    _
  %s13 = ssub.s32 1, %s11
  %s14 = scalar_select 0, %s13, %s11
  $region1: #{embedding1d_forward.1} parent=0
    #allocation2 [shape = 'u8[512]{0}', space=smem, size = 0x200, scoped, tag = 'input window, operand 0, single buffered']
    #allocation3 [shape = 's32[1]{0}', space=sflag, size = 0x4, scoped, tag = 'scoped memory for embedding1d_forward.1']
    %15 = vsyncpa [#allocation3], 0
    // Predicated region
    $region2: #{embedding1d_forward.1} parent=1 // pred_check
      _
    $region3: #{embedding1d_forward.1} parent=1 // pred_check_branch
      %17 = sbr.rel (0) target = $region5
    $region4: #{embedding1d_forward.1} parent=1 // pred_region
      %s19 = ssub.s32 16, 16
      %20 = vsyncadd [#allocation3], %s19
      %s22 = sshll.u32 %s0, 4
      %s23 = int_to_ptr.vmem [resolvable:$true] %s22
      %25 = dma.vmem_to_smem %s23, 16, [#allocation2], [#allocation3]
    $region5: #{embedding1d_forward.1} parent=1 // pred_fallthru
      _
    // Predicated region
    $region6: #{embedding1d_forward.1} parent=1 // pred_check
      _
    $region7: #{embedding1d_forward.1} parent=1 // pred_check_branch
      %27 = sbr.rel (0) target = $region9
    $region8: #{embedding1d_forward.1} parent=1 // pred_region
      _
    $region9: #{embedding1d_forward.1} parent=1 // pred_fallthru
      _
    // Predicated region
    $region10: #{embedding1d_forward.1} parent=1 // pred_check
      _
    $region11: #{embedding1d_forward.1} parent=1 // pred_check_branch
      %29 = sbr.rel (0) target = $region13
    $region12: #{embedding1d_forward.1} parent=1 // pred_region
      _
    $region13: #{embedding1d_forward.1} parent=1 // pred_fallthru
      _
    // Predicated region
    $region14: #{embedding1d_forward.1} parent=1 // pred_check
      _
    $region15: #{embedding1d_forward.1} parent=1 // pred_check_branch
      %31 = sbr.rel (0) target = $region17
    $region16: #{embedding1d_forward.1} parent=1 // pred_region
      _
    $region17: #{embedding1d_forward.1} parent=1 // pred_fallthru
      _
    // Predicated region
    $region18: #{embedding1d_forward.1} parent=1 // pred_check
      _
    $region19: #{embedding1d_forward.1} parent=1 // pred_check_branch
      %33 = sbr.rel (0) target = $region21
    $region20: #{embedding1d_forward.1} parent=1 // pred_region
      _
    $region21: #{embedding1d_forward.1} parent=1 // pred_fallthru
      _
    // Predicated region
    $region22: #{embedding1d_forward.1} parent=1 // pred_check
      _
    $region23: #{embedding1d_forward.1} parent=1 // pred_check_branch
      %35 = sbr.rel (0) target = $region25
    $region24: #{embedding1d_forward.1} parent=1 // pred_region
      _
    $region25: #{embedding1d_forward.1} parent=1 // pred_fallthru
      _
    // Predicated region
    $region26: #{embedding1d_forward.1} parent=1 // pred_check
      _
    $region27: #{embedding1d_forward.1} parent=1 // pred_check_branch
      %37 = sbr.rel (0) target = $region29
    $region28: #{embedding1d_forward.1} parent=1 // pred_region
      _
    $region29: #{embedding1d_forward.1} parent=1 // pred_fallthru
      _
    // Predicated region
    $region30: #{embedding1d_forward.1} parent=1 // pred_check
      _
    $region31: #{embedding1d_forward.1} parent=1 // pred_check_branch
      %39 = sbr.rel (0) target = $region33
    $region32: #{embedding1d_forward.1} parent=1 // pred_region
      _
    $region33: #{embedding1d_forward.1} parent=1 // pred_fallthru
      _
    // Predicated region
    $region34: #{embedding1d_forward.1} parent=1 // pred_check
      _
    $region35: #{embedding1d_forward.1} parent=1 // pred_check_branch
      %41 = sbr.rel (0) target = $region37
    $region36: #{embedding1d_forward.1} parent=1 // pred_region
      _
    $region37: #{embedding1d_forward.1} parent=1 // pred_fallthru
      _
    // Predicated region
    $region38: #{embedding1d_forward.1} parent=1 // pred_check
      _
    $region39: #{embedding1d_forward.1} parent=1 // pred_check_branch
      %43 = sbr.rel (0) target = $region41
    $region40: #{embedding1d_forward.1} parent=1 // pred_region
      _
    $region41: #{embedding1d_forward.1} parent=1 // pred_fallthru
      _
    // Predicated region
    $region42: #{embedding1d_forward.1} parent=1 // pred_check
      _
    $region43: #{embedding1d_forward.1} parent=1 // pred_check_branch
      %45 = sbr.rel (0) target = $region45
    $region44: #{embedding1d_forward.1} parent=1 // pred_region
      %46 = dma.done [#allocation3], 16
    $region45: #{embedding1d_forward.1} parent=1 // pred_fallthru
      _
    %47 = sfence
    %s49 = sld [smem:[#allocation2]]
    %s50 = sld [smem:[#allocation2 + $0x1]]
    %s51 = sld [smem:[#allocation2 + $0x2]]
    %v52 = vld [vmem:[%s1] sm:$0xff]
    %v53 = vld [vmem:[%s1 + $0x8] sm:$0xff]
    %v54 = vld [vmem:[%s1 + $0x10] sm:$0xff]
    %v55 = vld [vmem:[%s1 + $0x18] sm:$0xff]
    %v56 = vpack.c.bf16 %v54, %v52
    %v57 = vpack.c.bf16 %v55, %v53
    %v58 = vld [vmem:[%s2] sm:$0xff]
    %v59 = vld [vmem:[%s2 + $0x8] sm:$0xff]
    %v60 = vld [vmem:[%s2 + $0x10] sm:$0xff]
    %v61 = vld [vmem:[%s2 + $0x18] sm:$0xff]
    %v62 = vld [vmem:[%s2 + $0x20] sm:$0xff]
    %v63 = vld [vmem:[%s2 + $0x28] sm:$0xff]
    %v64 = vld [vmem:[%s2 + $0x30] sm:$0xff]
    %v65 = vld [vmem:[%s2 + $0x38] sm:$0xff]
    %v66 = vld [vmem:[%s2 + $0x40] sm:$0xff]
    %v67 = vld [vmem:[%s2 + $0x48] sm:$0xff]
    %v68 = vld [vmem:[%s2 + $0x50] sm:$0xff]
    %v69 = vld [vmem:[%s2 + $0x58] sm:$0xff]
    %v70 = vld [vmem:[%s2 + $0x60] sm:$0xff]
    %v71 = vld [vmem:[%s2 + $0x68] sm:$0xff]
    %v72 = vld [vmem:[%s2 + $0x70] sm:$0xff]
    %v73 = vld [vmem:[%s2 + $0x78] sm:$0xff]
    %v74 = vld [vmem:[%s2 + $0x80] sm:$0xff]
    %v75 = vld [vmem:[%s2 + $0x88] sm:$0xff]
    %v76 = vld [vmem:[%s2 + $0x90] sm:$0xff]
    %v77 = vld [vmem:[%s2 + $0x98] sm:$0xff]
    %v78 = vld [vmem:[%s2 + $0xa0] sm:$0xff]
    %v79 = vld [vmem:[%s2 + $0xa8] sm:$0xff]
    %v80 = vld [vmem:[%s2 + $0xb0] sm:$0xff]
    %v81 = vld [vmem:[%s2 + $0xb8] sm:$0xff]
    %v82 = vld [vmem:[%s2 + $0xc0] sm:$0xff]
    %v83 = vld [vmem:[%s2 + $0xc8] sm:$0xff]
    %v84 = vld [vmem:[%s2 + $0xd0] sm:$0xff]
    %v85 = vld [vmem:[%s2 + $0xd8] sm:$0xff]
    %v86 = vld [vmem:[%s2 + $0xe0] sm:$0xff]
    %v87 = vld [vmem:[%s2 + $0xe8] sm:$0xff]
    %v88 = vld [vmem:[%s2 + $0xf0] sm:$0xff]
    %v89 = vld [vmem:[%s2 + $0xf8] sm:$0xff]
    %v90 = vld [vmem:[%s2 + $0x100] sm:$0xff]
    %v91 = vld [vmem:[%s2 + $0x108] sm:$0xff]
    %v92 = vld [vmem:[%s2 + $0x110] sm:$0xff]
    %v93 = vld [vmem:[%s2 + $0x118] sm:$0xff]
    %v94 = vld [vmem:[%s2 + $0x120] sm:$0xff]
    %v95 = vld [vmem:[%s2 + $0x128] sm:$0xff]
    %v96 = vld [vmem:[%s2 + $0x130] sm:$0xff]
    %v97 = vld [vmem:[%s2 + $0x138] sm:$0xff]
    %v98 = vld [vmem:[%s2 + $0x140] sm:$0xff]
    %v99 = vld [vmem:[%s2 + $0x148] sm:$0xff]
    %v100 = vld [vmem:[%s2 + $0x150] sm:$0xff]
    %v101 = vld [vmem:[%s2 + $0x158] sm:$0xff]
    %v102 = vld [vmem:[%s2 + $0x160] sm:$0xff]
    %v103 = vld [vmem:[%s2 + $0x168] sm:$0xff]
    %v104 = vld [vmem:[%s2 + $0x170] sm:$0xff]
    %v105 = vld [vmem:[%s2 + $0x178] sm:$0xff]
    %v106 = vld [vmem:[%s2 + $0x180] sm:$0xff]
    %v107 = vld [vmem:[%s2 + $0x188] sm:$0xff]
    %v108 = vld [vmem:[%s2 + $0x190] sm:$0xff]
    %v109 = vld [vmem:[%s2 + $0x198] sm:$0xff]
    %v110 = vld [vmem:[%s2 + $0x1a0] sm:$0xff]
    %v111 = vld [vmem:[%s2 + $0x1a8] sm:$0xff]
    %v112 = vld [vmem:[%s2 + $0x1b0] sm:$0x77]
    %v113 = vld [vmem:[%s2 + $0x1b8] sm:$0x77]
    %v114 = vld [vmem:[%s2 + $0x1c0] sm:$0x77]
    %v115 = vld [vmem:[%s3] sm:$0x3f]
    %v117 = vlaneseq
    %v118 = vshrl.u32 %v117, 7
    %v119 = vsub.s32 0, %v118
    %v120 = vrot.slane %v115, %v119
    %v121 = vlaneseq
    %v122 = vshrl.u32 %v121, 7
    %v123 = vsub.s32 1, %v122
    %v124 = vrot.slane %v115, %v123
    %v125 = vlaneseq
    %v126 = vshrl.u32 %v125, 7
    %v127 = vsub.s32 2, %v126
    %v128 = vrot.slane %v115, %v127
    %v129 = vlaneseq
    %v130 = vshrl.u32 %v129, 7
    %v131 = vsub.s32 3, %v130
    %v132 = vrot.slane %v115, %v131
    %v133 = vlaneseq
    %v134 = vshrl.u32 %v133, 7
    %v135 = vsub.s32 4, %v134
    %v136 = vrot.slane %v115, %v135
    %v137 = vlaneseq
    %v138 = vshrl.u32 %v137, 7
    %v139 = vsub.s32 5, %v138
    %v140 = vrot.slane %v115, %v139
    %v204 = vunpack.c.l.b16 %v58
    %v205 = vunpack.c.h.b16 %v58
    %v206 = vunpack.c.l.b16 %v59
    %v207 = vunpack.c.h.b16 %v59
    %v208 = vunpack.c.l.b16 %v60
    %v209 = vunpack.c.h.b16 %v60
    %v210 = vunpack.c.l.b16 %v61
    %v211 = vunpack.c.h.b16 %v61
    %v212 = vunpack.c.l.b16 %v62
    %v213 = vunpack.c.h.b16 %v62
    %v214 = vunpack.c.l.b16 %v63
    %v215 = vunpack.c.h.b16 %v63
    %v216 = vunpack.c.l.b16 %v64
    %v217 = vunpack.c.h.b16 %v64
    %v218 = vunpack.c.l.b16 %v65
    %v219 = vunpack.c.h.b16 %v65
    %v220 = vunpack.c.l.b16 %v66
    %v221 = vunpack.c.h.b16 %v66
    %v222 = vunpack.c.l.b16 %v67
    %v223 = vunpack.c.h.b16 %v67
    %v224 = vunpack.c.l.b16 %v68
    %v225 = vunpack.c.h.b16 %v68
    %v226 = vunpack.c.l.b16 %v69
    %v227 = vunpack.c.h.b16 %v69
    %v228 = vunpack.c.l.b16 %v70
    %v229 = vunpack.c.h.b16 %v70
    %v230 = vunpack.c.l.b16 %v71
    %v231 = vunpack.c.h.b16 %v71
    %v232 = vunpack.c.l.b16 %v72
    %v233 = vunpack.c.h.b16 %v72
    %v234 = vunpack.c.l.b16 %v73
    %v235 = vunpack.c.h.b16 %v73
    %v236 = vunpack.c.l.b16 %v74
    %v237 = vunpack.c.h.b16 %v74
    %v238 = vunpack.c.l.b16 %v75
    %v239 = vunpack.c.h.b16 %v75
    %v240 = vunpack.c.l.b16 %v76
    %v241 = vunpack.c.h.b16 %v76
    %v242 = vunpack.c.l.b16 %v77
    %v243 = vunpack.c.h.b16 %v77
    %v244 = vunpack.c.l.b16 %v78
    %v245 = vunpack.c.h.b16 %v78
    %v246 = vunpack.c.l.b16 %v79
    %v247 = vunpack.c.h.b16 %v79
    %v248 = vunpack.c.l.b16 %v80
    %v249 = vunpack.c.h.b16 %v80
    %v250 = vunpack.c.l.b16 %v81
    %v251 = vunpack.c.h.b16 %v81
    %v252 = vunpack.c.l.b16 %v82
    %v253 = vunpack.c.h.b16 %v82
    %v254 = vunpack.c.l.b16 %v83
    %v255 = vunpack.c.h.b16 %v83
    %v256 = vunpack.c.l.b16 %v84
    %v257 = vunpack.c.h.b16 %v84
    %v258 = vunpack.c.l.b16 %v85
    %v259 = vunpack.c.h.b16 %v85
    %v260 = vunpack.c.l.b16 %v86
    %v261 = vunpack.c.h.b16 %v86
    %v262 = vunpack.c.l.b16 %v87
    %v263 = vunpack.c.h.b16 %v87
    %v264 = vunpack.c.l.b16 %v88
    %v265 = vunpack.c.h.b16 %v88
    %v266 = vunpack.c.l.b16 %v89
    %v267 = vunpack.c.h.b16 %v89
    %v268 = vunpack.c.l.b16 %v90
    %v269 = vunpack.c.h.b16 %v90
    %v270 = vunpack.c.l.b16 %v91
    %v271 = vunpack.c.h.b16 %v91
    %v272 = vunpack.c.l.b16 %v92
    %v273 = vunpack.c.h.b16 %v92
    %v274 = vunpack.c.l.b16 %v93
    %v275 = vunpack.c.h.b16 %v93
    %v276 = vunpack.c.l.b16 %v94
    %v277 = vunpack.c.h.b16 %v94
    %v278 = vunpack.c.l.b16 %v95
    %v279 = vunpack.c.h.b16 %v95
    %v280 = vunpack.c.l.b16 %v96
    %v281 = vunpack.c.h.b16 %v96
    %v282 = vunpack.c.l.b16 %v97
    %v283 = vunpack.c.h.b16 %v97
    %v284 = vunpack.c.l.b16 %v98
    %v285 = vunpack.c.h.b16 %v98
    %v286 = vunpack.c.l.b16 %v99
    %v287 = vunpack.c.h.b16 %v99
    %v288 = vunpack.c.l.b16 %v100
    %v289 = vunpack.c.h.b16 %v100
    %v290 = vunpack.c.l.b16 %v101
    %v291 = vunpack.c.h.b16 %v101
    %v292 = vunpack.c.l.b16 %v102
    %v293 = vunpack.c.h.b16 %v102
    %v294 = vunpack.c.l.b16 %v103
    %v295 = vunpack.c.h.b16 %v103
    %v296 = vunpack.c.l.b16 %v104
    %v297 = vunpack.c.h.b16 %v104
    %v298 = vunpack.c.l.b16 %v105
    %v299 = vunpack.c.h.b16 %v105
    %v300 = vunpack.c.l.b16 %v106
    %v301 = vunpack.c.h.b16 %v106
    %v302 = vunpack.c.l.b16 %v107
    %v303 = vunpack.c.h.b16 %v107
    %v304 = vunpack.c.l.b16 %v108
    %v305 = vunpack.c.h.b16 %v108
    %v306 = vunpack.c.l.b16 %v109
    %v307 = vunpack.c.h.b16 %v109
    %v308 = vunpack.c.l.b16 %v110
    %v309 = vunpack.c.h.b16 %v110
    %v310 = vunpack.c.l.b16 %v111
    %v311 = vunpack.c.h.b16 %v111
    %v312 = vunpack.c.l.b16 %v112
    %v313 = vunpack.c.h.b16 %v112
    %v314 = vunpack.c.l.b16 %v113
    %v315 = vunpack.c.h.b16 %v113
    %v316 = vunpack.c.l.b16 %v114
    %v317 = vunpack.c.h.b16 %v114
    %v318 = vpack.c.b16 %v210, %v204
    %v319 = vpack.c.b16 %v211, %v205
    %v320 = vpack.c.b16 %v212, %v206
    %v321 = vpack.c.b16 %v213, %v207
    %v322 = vpack.c.b16 %v214, %v208
    %v323 = vpack.c.b16 %v215, %v209
    %v324 = vpack.c.b16 %v222, %v216
    %v325 = vpack.c.b16 %v223, %v217
    %v326 = vpack.c.b16 %v224, %v218
    %v327 = vpack.c.b16 %v225, %v219
    %v328 = vpack.c.b16 %v226, %v220
    %v329 = vpack.c.b16 %v227, %v221
    %v330 = vpack.c.b16 %v234, %v228
    %v331 = vpack.c.b16 %v235, %v229
    %v332 = vpack.c.b16 %v236, %v230
    %v333 = vpack.c.b16 %v237, %v231
    %v334 = vpack.c.b16 %v238, %v232
    %v335 = vpack.c.b16 %v239, %v233
    %v336 = vpack.c.b16 %v246, %v240
    %v337 = vpack.c.b16 %v247, %v241
    %v338 = vpack.c.b16 %v248, %v242
    %v339 = vpack.c.b16 %v249, %v243
    %v340 = vpack.c.b16 %v250, %v244
    %v341 = vpack.c.b16 %v251, %v245
    %v342 = vpack.c.b16 %v258, %v252
    %v343 = vpack.c.b16 %v259, %v253
    %v344 = vpack.c.b16 %v260, %v254
    %v345 = vpack.c.b16 %v261, %v255
    %v346 = vpack.c.b16 %v262, %v256
    %v347 = vpack.c.b16 %v263, %v257
    %v348 = vpack.c.b16 %v270, %v264
    %v349 = vpack.c.b16 %v271, %v265
    %v350 = vpack.c.b16 %v272, %v266
    %v351 = vpack.c.b16 %v273, %v267
    %v352 = vpack.c.b16 %v274, %v268
    %v353 = vpack.c.b16 %v275, %v269
    %v354 = vpack.c.b16 %v282, %v276
    %v355 = vpack.c.b16 %v283, %v277
    %v356 = vpack.c.b16 %v284, %v278
    %v357 = vpack.c.b16 %v285, %v279
    %v358 = vpack.c.b16 %v286, %v280
    %v359 = vpack.c.b16 %v287, %v281
    %v360 = vpack.c.b16 %v294, %v288
    %v361 = vpack.c.b16 %v295, %v289
    %v362 = vpack.c.b16 %v296, %v290
    %v363 = vpack.c.b16 %v297, %v291
    %v364 = vpack.c.b16 %v298, %v292
    %v365 = vpack.c.b16 %v299, %v293
    %v366 = vpack.c.b16 %v306, %v300
    %v367 = vpack.c.b16 %v307, %v301
    %v368 = vpack.c.b16 %v308, %v302
    %v369 = vpack.c.b16 %v309, %v303
    %v370 = vpack.c.b16 %v310, %v304
    %v371 = vpack.c.b16 %v311, %v305
    %v372 = vpack.c.b16 %v312, %v312
    %v373 = vpack.c.b16 %v313, %v313
    %v374 = vpack.c.b16 %v314, %v314
    %v375 = vpack.c.b16 %v315, %v315
    %v376 = vpack.c.b16 %v316, %v316
    %v377 = vpack.c.b16 %v317, %v317
    %vm432 = vcmask 179200
    %v434 = vsel %vm432, %v57, 0
    %vm436 = vcmask 1042432
    %v438 = vsel %vm436, %v372, 0
    %v441 = vsel %vm436, %v373, 0
    %v444 = vsel %vm436, %v374, 0
    %v447 = vsel %vm436, %v375, 0
    %v450 = vsel %vm436, %v376, 0
    %v453 = vsel %vm436, %v377, 0
    %455 = vmatprep.subr.bf16.mxu0 %v319
    %456 = vmatpush1.bf16.msra.mxu0 %v318
    %457 = vmatprep.subr.bf16.mxu0 %v325
    %458 = vmatpush1.bf16.msra.mxu0 %v324
    %459 = vmatprep.subr.bf16.mxu0 %v331
    %460 = vmatpush1.bf16.msra.mxu0 %v330
    %461 = vmatprep.subr.bf16.mxu0 %v337
    %462 = vmatpush1.bf16.msra.mxu0 %v336
    %463 = vmatprep.subr.bf16.mxu0 %v343
    %464 = vmatpush1.bf16.msra.mxu0 %v342
    %465 = vmatprep.subr.bf16.mxu0 %v349
    %466 = vmatpush1.bf16.msra.mxu0 %v348
    %467 = vmatprep.subr.bf16.mxu0 %v355
    %468 = vmatpush1.bf16.msra.mxu0 %v354
    %469 = vmatprep.subr.bf16.mxu0 %v361
    %470 = vmatpush1.bf16.msra.mxu0 %v360
    %471 = vmatprep.subr.bf16.mxu0 %v367
    %472 = vmatpush1.bf16.msra.mxu0 %v366
    %473 = vmatprep.subr.bf16.mxu0 %v441
    %474 = vmatpush1.bf16.msra.mxu0 %v438
    %475 = vmatprep.subr.bf16.mxu0 0
    %476 = vmatpush1.bf16.msra.mxu0 0
    %477 = vmatprep.subr.bf16.mxu0 0
    %478 = vmatpush1.bf16.msra.mxu0 0
    %479 = vmatprep.subr.bf16.mxu0 0
    %480 = vmatpush1.bf16.msra.mxu0 0
    %481 = vmatprep.subr.bf16.mxu0 0
    %482 = vmatpush1.bf16.msra.mxu0 0
    %483 = vmatprep.subr.bf16.mxu0 0
    %484 = vmatpush1.bf16.msra.mxu0 0
    %485 = vmatprep.subr.bf16.mxu0 0
    %486 = vmatpush1.bf16.msra.mxu0 0
    %487 = vmatprep.mubr.bf16.mxu0 %v434
    %488 = vmatmul.mubr.bf16.gmra.mrb[0].mxu0 %v56
    %v489 = vpop.f32.mrb[0].mxu0
    %v490 = vadd.f32 %v120, %v489
    %v491 = vpop.f32.mrb[0].mxu0
    %v492 = vadd.f32 %v124, %v491
    %v493 = vpop.f32.mrb[0].mxu0
    %v494 = vadd.f32 %v120, %v493
    %v495 = vpop.f32.mrb[0].mxu0
    %v496 = vadd.f32 %v124, %v495
    %497 = vdwg.mxu0
    %498 = vmatprep.subr.bf16.mxu0 %v321
    %499 = vmatpush1.bf16.msra.mxu0 %v320
    %500 = vmatprep.subr.bf16.mxu0 %v327
    %501 = vmatpush1.bf16.msra.mxu0 %v326
    %502 = vmatprep.subr.bf16.mxu0 %v333
    %503 = vmatpush1.bf16.msra.mxu0 %v332
    %504 = vmatprep.subr.bf16.mxu0 %v339
    %505 = vmatpush1.bf16.msra.mxu0 %v338
    %506 = vmatprep.subr.bf16.mxu0 %v345
    %507 = vmatpush1.bf16.msra.mxu0 %v344
    %508 = vmatprep.subr.bf16.mxu0 %v351
    %509 = vmatpush1.bf16.msra.mxu0 %v350
    %510 = vmatprep.subr.bf16.mxu0 %v357
    %511 = vmatpush1.bf16.msra.mxu0 %v356
    %512 = vmatprep.subr.bf16.mxu0 %v363
    %513 = vmatpush1.bf16.msra.mxu0 %v362
    %514 = vmatprep.subr.bf16.mxu0 %v369
    %515 = vmatpush1.bf16.msra.mxu0 %v368
    %516 = vmatprep.subr.bf16.mxu0 %v447
    %517 = vmatpush1.bf16.msra.mxu0 %v444
    %518 = vmatprep.subr.bf16.mxu0 0
    %519 = vmatpush1.bf16.msra.mxu0 0
    %520 = vmatprep.subr.bf16.mxu0 0
    %521 = vmatpush1.bf16.msra.mxu0 0
    %522 = vmatprep.subr.bf16.mxu0 0
    %523 = vmatpush1.bf16.msra.mxu0 0
    %524 = vmatprep.subr.bf16.mxu0 0
    %525 = vmatpush1.bf16.msra.mxu0 0
    %526 = vmatprep.subr.bf16.mxu0 0
    %527 = vmatpush1.bf16.msra.mxu0 0
    %528 = vmatprep.subr.bf16.mxu0 0
    %529 = vmatpush1.bf16.msra.mxu0 0
    %530 = vmatprep.mubr.bf16.mxu0 %v434
    %531 = vmatmul.mubr.bf16.gmra.mrb[0].mxu0 %v56
    %v532 = vpop.f32.mrb[0].mxu0
    %v533 = vadd.f32 %v128, %v532
    %v534 = vpop.f32.mrb[0].mxu0
    %v535 = vadd.f32 %v132, %v534
    %v536 = vpop.f32.mrb[0].mxu0
    %v537 = vadd.f32 %v128, %v536
    %v538 = vpop.f32.mrb[0].mxu0
    %v539 = vadd.f32 %v132, %v538
    %540 = vdwg.mxu0
    %541 = vmatprep.subr.bf16.mxu0 %v323
    %542 = vmatpush1.bf16.msra.mxu0 %v322
    %543 = vmatprep.subr.bf16.mxu0 %v329
    %544 = vmatpush1.bf16.msra.mxu0 %v328
    %545 = vmatprep.subr.bf16.mxu0 %v335
    %546 = vmatpush1.bf16.msra.mxu0 %v334
    %547 = vmatprep.subr.bf16.mxu0 %v341
    %548 = vmatpush1.bf16.msra.mxu0 %v340
    %549 = vmatprep.subr.bf16.mxu0 %v347
    %550 = vmatpush1.bf16.msra.mxu0 %v346
    %551 = vmatprep.subr.bf16.mxu0 %v353
    %552 = vmatpush1.bf16.msra.mxu0 %v352
    %553 = vmatprep.subr.bf16.mxu0 %v359
    %554 = vmatpush1.bf16.msra.mxu0 %v358
    %555 = vmatprep.subr.bf16.mxu0 %v365
    %556 = vmatpush1.bf16.msra.mxu0 %v364
    %557 = vmatprep.subr.bf16.mxu0 %v371
    %558 = vmatpush1.bf16.msra.mxu0 %v370
    %559 = vmatprep.subr.bf16.mxu0 %v453
    %560 = vmatpush1.bf16.msra.mxu0 %v450
    %561 = vmatprep.subr.bf16.mxu0 0
    %562 = vmatpush1.bf16.msra.mxu0 0
    %563 = vmatprep.subr.bf16.mxu0 0
    %564 = vmatpush1.bf16.msra.mxu0 0
    %565 = vmatprep.subr.bf16.mxu0 0
    %566 = vmatpush1.bf16.msra.mxu0 0
    %567 = vmatprep.subr.bf16.mxu0 0
    %568 = vmatpush1.bf16.msra.mxu0 0
    %569 = vmatprep.subr.bf16.mxu0 0
    %570 = vmatpush1.bf16.msra.mxu0 0
    %571 = vmatprep.subr.bf16.mxu0 0
    %572 = vmatpush1.bf16.msra.mxu0 0
    %573 = vmatprep.mubr.bf16.mxu0 %v434
    %574 = vmatmul.mubr.bf16.gmra.mrb[0].mxu0 %v56
    %v575 = vpop.f32.mrb[0].mxu0
    %v576 = vadd.f32 %v136, %v575
    %v577 = vpop.f32.mrb[0].mxu0
    %v578 = vadd.f32 %v140, %v577
    %v579 = vpop.f32.mrb[0].mxu0
    %v580 = vadd.f32 %v136, %v579
    %v581 = vpop.f32.mrb[0].mxu0
    %v582 = vadd.f32 %v140, %v581
    %583 = vdwg.mxu0
    %vm584 = vcmp.ge.f32.partialorder %v490, 0.0
    %vm585 = vcmp.ge.f32.partialorder %v492, 0.0
    %vm586 = vcmp.ge.f32.partialorder %v533, 0.0
    %vm587 = vcmp.ge.f32.partialorder %v494, 0.0
    %vm588 = vcmp.ge.f32.partialorder %v496, 0.0
    %vm589 = vcmp.ge.f32.partialorder %v537, 0.0
    %v590 = vstv %s49
    %v591 = vmul.f32 %v590, %v490
    %v592 = vmul.f32 %v590, %v492
    %v593 = vmul.f32 %v590, %v533
    %v594 = vmul.f32 %v590, %v494
    %v595 = vmul.f32 %v590, %v496
    %v596 = vmul.f32 %v590, %v537
    %v597 = vsel %vm584, %v490, %v591
    %v598 = vsel %vm585, %v492, %v592
    %v599 = vsel %vm586, %v533, %v593
    %v600 = vsel %vm587, %v494, %v594
    %v601 = vsel %vm588, %v496, %v595
    %v602 = vsel %vm589, %v537, %v596
    %vm603 = vcmp.ge.f32.partialorder %v535, 0.0
    %vm604 = vcmp.ge.f32.partialorder %v576, 0.0
    %vm605 = vcmp.ge.f32.partialorder %v578, 0.0
    %vm606 = vcmp.ge.f32.partialorder %v539, 0.0
    %vm607 = vcmp.ge.f32.partialorder %v580, 0.0
    %vm608 = vcmp.ge.f32.partialorder %v582, 0.0
    %v609 = vmul.f32 %v590, %v535
    %v610 = vmul.f32 %v590, %v576
    %v611 = vmul.f32 %v590, %v578
    %v612 = vmul.f32 %v590, %v539
    %v613 = vmul.f32 %v590, %v580
    %v614 = vmul.f32 %v590, %v582
    %v615 = vsel %vm603, %v535, %v609
    %v616 = vsel %vm604, %v576, %v610
    %v617 = vsel %vm605, %v578, %v611
    %v618 = vsel %vm606, %v539, %v612
    %v619 = vsel %vm607, %v580, %v613
    %v620 = vsel %vm608, %v582, %v614
    %v621 = vmax.f32 %v597, %v615
    %v622 = vmax.f32 %v598, %v616
    %v623 = vmax.f32 %v599, %v617
    %v624 = vmax.f32 %v600, %v618
    %v625 = vmax.f32 %v601, %v619
    %v626 = vmax.f32 %v602, %v620
    %v627 = vpack.c.bf16 %v624, %v621
    %v628 = vpack.c.bf16 %v625, %v622
    %v629 = vpack.c.bf16 %v626, %v623
    %v630 = vld [vmem:[%s4] sm:$0xff]
    %v631 = vld [vmem:[%s4 + $0x8] sm:$0xff]
    %v632 = vld [vmem:[%s4 + $0x10] sm:$0xff]
    %v633 = vld [vmem:[%s4 + $0x18] sm:$0xff]
    %v634 = vld [vmem:[%s4 + $0x20] sm:$0xff]
    %v635 = vld [vmem:[%s4 + $0x28] sm:$0xff]
    %v636 = vld [vmem:[%s4 + $0x30] sm:$0xff]
    %v637 = vld [vmem:[%s4 + $0x38] sm:$0xff]
    %v638 = vld [vmem:[%s4 + $0x40] sm:$0xff]
    %v639 = vld [vmem:[%s4 + $0x48] sm:$0xff]
    %v640 = vld [vmem:[%s4 + $0x50] sm:$0xff]
    %v641 = vld [vmem:[%s4 + $0x58] sm:$0xff]
    %v642 = vld [vmem:[%s4 + $0x60] sm:$0xff]
    %v643 = vld [vmem:[%s4 + $0x68] sm:$0xff]
    %v644 = vld [vmem:[%s4 + $0x70] sm:$0xff]
    %v645 = vld [vmem:[%s4 + $0x78] sm:$0xff]
    %v646 = vld [vmem:[%s4 + $0x80] sm:$0xff]
    %v647 = vld [vmem:[%s4 + $0x88] sm:$0xff]
    %v648 = vld [vmem:[%s4 + $0x90] sm:$0xff]
    %v649 = vld [vmem:[%s4 + $0x98] sm:$0xff]
    %v650 = vld [vmem:[%s4 + $0xa0] sm:$0xff]
    %v651 = vld [vmem:[%s4 + $0xa8] sm:$0xff]
    %v652 = vld [vmem:[%s4 + $0xb0] sm:$0xff]
    %v653 = vld [vmem:[%s4 + $0xb8] sm:$0xff]
    %v654 = vld [vmem:[%s4 + $0xc0] sm:$0xff]
    %v655 = vld [vmem:[%s4 + $0xc8] sm:$0xff]
    %v656 = vld [vmem:[%s4 + $0xd0] sm:$0xff]
    %v657 = vld [vmem:[%s4 + $0xd8] sm:$0xff]
    %v658 = vld [vmem:[%s4 + $0xe0] sm:$0xff]
    %v659 = vld [vmem:[%s4 + $0xe8] sm:$0xff]
    %v660 = vld [vmem:[%s4 + $0xf0] sm:$0xff]
    %v661 = vld [vmem:[%s4 + $0xf8] sm:$0xff]
    %v662 = vld [vmem:[%s4 + $0x100] sm:$0xff]
    %v663 = vld [vmem:[%s4 + $0x108] sm:$0xff]
    %v664 = vld [vmem:[%s4 + $0x110] sm:$0xff]
    %v665 = vld [vmem:[%s4 + $0x118] sm:$0xff]
    %v666 = vld [vmem:[%s4 + $0x120] sm:$0xff]
    %v667 = vld [vmem:[%s4 + $0x128] sm:$0xff]
    %v668 = vld [vmem:[%s4 + $0x130] sm:$0xff]
    %v669 = vld [vmem:[%s4 + $0x138] sm:$0xff]
    %v670 = vld [vmem:[%s4 + $0x140] sm:$0xff]
    %v671 = vld [vmem:[%s4 + $0x148] sm:$0xff]
    %v672 = vld [vmem:[%s4 + $0x150] sm:$0xff]
    %v673 = vld [vmem:[%s4 + $0x158] sm:$0xff]
    %v674 = vld [vmem:[%s4 + $0x160] sm:$0xff]
    %v675 = vld [vmem:[%s4 + $0x168] sm:$0xff]
    %v676 = vld [vmem:[%s4 + $0x170] sm:$0xff]
    %v677 = vld [vmem:[%s4 + $0x178] sm:$0xff]
    %v678 = vld [vmem:[%s4 + $0x180] sm:$0xff]
    %v679 = vld [vmem:[%s4 + $0x188] sm:$0xff]
    %v680 = vld [vmem:[%s4 + $0x190] sm:$0xff]
    %v681 = vld [vmem:[%s4 + $0x198] sm:$0xff]
    %v682 = vld [vmem:[%s4 + $0x1a0] sm:$0xff]
    %v683 = vld [vmem:[%s4 + $0x1a8] sm:$0xff]
    %v684 = vld [vmem:[%s4 + $0x1b0] sm:$0xff]
    %v685 = vld [vmem:[%s4 + $0x1b8] sm:$0xff]
    %v686 = vld [vmem:[%s4 + $0x1c0] sm:$0xff]
    %v687 = vld [vmem:[%s4 + $0x1c8] sm:$0xff]
    %v688 = vld [vmem:[%s4 + $0x1d0] sm:$0xff]
    %v689 = vld [vmem:[%s4 + $0x1d8] sm:$0xff]
    %v690 = vld [vmem:[%s4 + $0x1e0] sm:$0xff]
    %v691 = vld [vmem:[%s4 + $0x1e8] sm:$0xff]
    %v692 = vld [vmem:[%s4 + $0x1f0] sm:$0xff]
    %v693 = vld [vmem:[%s4 + $0x1f8] sm:$0xff]
    %v694 = vld [vmem:[%s4 + $0x200] sm:$0xff]
    %v695 = vld [vmem:[%s4 + $0x208] sm:$0xff]
    %v696 = vld [vmem:[%s4 + $0x210] sm:$0xff]
    %v697 = vld [vmem:[%s4 + $0x218] sm:$0xff]
    %v698 = vld [vmem:[%s4 + $0x220] sm:$0xff]
    %v699 = vld [vmem:[%s4 + $0x228] sm:$0xff]
    %v700 = vld [vmem:[%s4 + $0x230] sm:$0xff]
    %v701 = vld [vmem:[%s4 + $0x238] sm:$0xff]
    %v702 = vld [vmem:[%s4 + $0x240] sm:$0xff]
    %v703 = vld [vmem:[%s4 + $0x248] sm:$0xff]
    %v704 = vld [vmem:[%s4 + $0x250] sm:$0xff]
    %v705 = vld [vmem:[%s4 + $0x258] sm:$0xff]
    %v706 = vld [vmem:[%s4 + $0x260] sm:$0xff]
    %v707 = vld [vmem:[%s4 + $0x268] sm:$0xff]
    %v708 = vld [vmem:[%s4 + $0x270] sm:$0xff]
    %v709 = vld [vmem:[%s4 + $0x278] sm:$0xff]
    %v710 = vld [vmem:[%s4 + $0x280] sm:$0xff]
    %v711 = vld [vmem:[%s4 + $0x288] sm:$0xff]
    %v712 = vld [vmem:[%s4 + $0x290] sm:$0xff]
    %v713 = vld [vmem:[%s4 + $0x298] sm:$0xff]
    %v714 = vld [vmem:[%s4 + $0x2a0] sm:$0xff]
    %v715 = vld [vmem:[%s4 + $0x2a8] sm:$0xff]
    %v716 = vld [vmem:[%s4 + $0x2b0] sm:$0xff]
    %v717 = vld [vmem:[%s4 + $0x2b8] sm:$0xff]
    %v718 = vld [vmem:[%s4 + $0x2c0] sm:$0xff]
    %v719 = vld [vmem:[%s4 + $0x2c8] sm:$0xff]
    %v720 = vld [vmem:[%s4 + $0x2d0] sm:$0xff]
    %v721 = vld [vmem:[%s4 + $0x2d8] sm:$0xff]
    %v722 = vld [vmem:[%s4 + $0x2e0] sm:$0xff]
    %v723 = vld [vmem:[%s4 + $0x2e8] sm:$0xff]
    %v724 = vld [vmem:[%s4 + $0x2f0] sm:$0xff]
    %v725 = vld [vmem:[%s4 + $0x2f8] sm:$0xff]
    %v726 = vld [vmem:[%s4 + $0x300] sm:$0xff]
    %v727 = vld [vmem:[%s4 + $0x308] sm:$0xff]
    %v728 = vld [vmem:[%s4 + $0x310] sm:$0xff]
    %v729 = vld [vmem:[%s4 + $0x318] sm:$0xff]
    %v730 = vld [vmem:[%s4 + $0x320] sm:$0xff]
    %v731 = vld [vmem:[%s4 + $0x328] sm:$0xff]
    %v732 = vld [vmem:[%s4 + $0x330] sm:$0xff]
    %v733 = vld [vmem:[%s4 + $0x338] sm:$0xff]
    %v734 = vld [vmem:[%s4 + $0x340] sm:$0xff]
    %v735 = vld [vmem:[%s4 + $0x348] sm:$0xff]
    %v736 = vld [vmem:[%s4 + $0x350] sm:$0xff]
    %v737 = vld [vmem:[%s4 + $0x358] sm:$0xff]
    %v738 = vld [vmem:[%s4 + $0x360] sm:$0xff]
    %v739 = vld [vmem:[%s4 + $0x368] sm:$0xff]
    %v740 = vld [vmem:[%s4 + $0x370] sm:$0xff]
    %v741 = vld [vmem:[%s4 + $0x378] sm:$0xff]
    %v742 = vld [vmem:[%s4 + $0x380] sm:$0xff]
    %v743 = vld [vmem:[%s4 + $0x388] sm:$0xff]
    %v744 = vld [vmem:[%s4 + $0x390] sm:$0xff]
    %v745 = vld [vmem:[%s4 + $0x398] sm:$0xff]
    %v746 = vld [vmem:[%s4 + $0x3a0] sm:$0xff]
    %v747 = vld [vmem:[%s4 + $0x3a8] sm:$0xff]
    %v748 = vld [vmem:[%s4 + $0x3b0] sm:$0xff]
    %v749 = vld [vmem:[%s4 + $0x3b8] sm:$0xff]
    %v750 = vld [vmem:[%s4 + $0x3c0] sm:$0xff]
    %v751 = vld [vmem:[%s4 + $0x3c8] sm:$0xff]
    %v752 = vld [vmem:[%s4 + $0x3d0] sm:$0xff]
    %v753 = vld [vmem:[%s4 + $0x3d8] sm:$0xff]
    %v754 = vld [vmem:[%s4 + $0x3e0] sm:$0xff]
    %v755 = vld [vmem:[%s4 + $0x3e8] sm:$0xff]
    %v756 = vld [vmem:[%s4 + $0x3f0] sm:$0xff]
    %v757 = vld [vmem:[%s4 + $0x3f8] sm:$0xff]
    %v758 = vld [vmem:[%s4 + $0x400] sm:$0xff]
    %v759 = vld [vmem:[%s4 + $0x408] sm:$0xff]
    %v760 = vld [vmem:[%s4 + $0x410] sm:$0xff]
    %v761 = vld [vmem:[%s4 + $0x418] sm:$0xff]
    %v762 = vld [vmem:[%s4 + $0x420] sm:$0xff]
    %v763 = vld [vmem:[%s4 + $0x428] sm:$0xff]
    %v764 = vld [vmem:[%s4 + $0x430] sm:$0xff]
    %v765 = vld [vmem:[%s4 + $0x438] sm:$0xff]
    %v766 = vld [vmem:[%s4 + $0x440] sm:$0xff]
    %v767 = vld [vmem:[%s4 + $0x448] sm:$0xff]
    %v768 = vld [vmem:[%s4 + $0x450] sm:$0xff]
    %v769 = vld [vmem:[%s4 + $0x458] sm:$0xff]
    %v770 = vld [vmem:[%s4 + $0x460] sm:$0xff]
    %v771 = vld [vmem:[%s4 + $0x468] sm:$0xff]
    %v772 = vld [vmem:[%s4 + $0x470] sm:$0xff]
    %v773 = vld [vmem:[%s4 + $0x478] sm:$0xff]
    %v774 = vld [vmem:[%s5] sm:$0x3f]
    %v776 = vlaneseq
    %v777 = vshrl.u32 %v776, 7
    %v778 = vsub.s32 0, %v777
    %v779 = vrot.slane %v774, %v778
    %v780 = vlaneseq
    %v781 = vshrl.u32 %v780, 7
    %v782 = vsub.s32 1, %v781
    %v783 = vrot.slane %v774, %v782
    %v784 = vlaneseq
    %v785 = vshrl.u32 %v784, 7
    %v786 = vsub.s32 2, %v785
    %v787 = vrot.slane %v774, %v786
    %v788 = vlaneseq
    %v789 = vshrl.u32 %v788, 7
    %v790 = vsub.s32 3, %v789
    %v791 = vrot.slane %v774, %v790
    %v792 = vlaneseq
    %v793 = vshrl.u32 %v792, 7
    %v794 = vsub.s32 4, %v793
    %v795 = vrot.slane %v774, %v794
    %v796 = vlaneseq
    %v797 = vshrl.u32 %v796, 7
    %v798 = vsub.s32 5, %v797
    %v799 = vrot.slane %v774, %v798
    %v950 = vunpack.c.l.b16 %v630
    %v951 = vunpack.c.h.b16 %v630
    %v952 = vunpack.c.l.b16 %v631
    %v953 = vunpack.c.h.b16 %v631
    %v954 = vunpack.c.l.b16 %v632
    %v955 = vunpack.c.h.b16 %v632
    %v956 = vunpack.c.l.b16 %v633
    %v957 = vunpack.c.h.b16 %v633
    %v958 = vunpack.c.l.b16 %v634
    %v959 = vunpack.c.h.b16 %v634
    %v960 = vunpack.c.l.b16 %v635
    %v961 = vunpack.c.h.b16 %v635
    %v962 = vunpack.c.l.b16 %v636
    %v963 = vunpack.c.h.b16 %v636
    %v964 = vunpack.c.l.b16 %v637
    %v965 = vunpack.c.h.b16 %v637
    %v966 = vunpack.c.l.b16 %v638
    %v967 = vunpack.c.h.b16 %v638
    %v968 = vunpack.c.l.b16 %v639
    %v969 = vunpack.c.h.b16 %v639
    %v970 = vunpack.c.l.b16 %v640
    %v971 = vunpack.c.h.b16 %v640
    %v972 = vunpack.c.l.b16 %v641
    %v973 = vunpack.c.h.b16 %v641
    %v974 = vunpack.c.l.b16 %v642
    %v975 = vunpack.c.h.b16 %v642
    %v976 = vunpack.c.l.b16 %v643
    %v977 = vunpack.c.h.b16 %v643
    %v978 = vunpack.c.l.b16 %v644
    %v979 = vunpack.c.h.b16 %v644
    %v980 = vunpack.c.l.b16 %v645
    %v981 = vunpack.c.h.b16 %v645
    %v982 = vunpack.c.l.b16 %v646
    %v983 = vunpack.c.h.b16 %v646
    %v984 = vunpack.c.l.b16 %v647
    %v985 = vunpack.c.h.b16 %v647
    %v986 = vunpack.c.l.b16 %v648
    %v987 = vunpack.c.h.b16 %v648
    %v988 = vunpack.c.l.b16 %v649
    %v989 = vunpack.c.h.b16 %v649
    %v990 = vunpack.c.l.b16 %v650
    %v991 = vunpack.c.h.b16 %v650
    %v992 = vunpack.c.l.b16 %v651
    %v993 = vunpack.c.h.b16 %v651
    %v994 = vunpack.c.l.b16 %v652
    %v995 = vunpack.c.h.b16 %v652
    %v996 = vunpack.c.l.b16 %v653
    %v997 = vunpack.c.h.b16 %v653
    %v998 = vunpack.c.l.b16 %v654
    %v999 = vunpack.c.h.b16 %v654
    %v1000 = vunpack.c.l.b16 %v655
    %v1001 = vunpack.c.h.b16 %v655
    %v1002 = vunpack.c.l.b16 %v656
    %v1003 = vunpack.c.h.b16 %v656
    %v1004 = vunpack.c.l.b16 %v657
    %v1005 = vunpack.c.h.b16 %v657
    %v1006 = vunpack.c.l.b16 %v658
    %v1007 = vunpack.c.h.b16 %v658
    %v1008 = vunpack.c.l.b16 %v659
    %v1009 = vunpack.c.h.b16 %v659
    %v1010 = vunpack.c.l.b16 %v660
    %v1011 = vunpack.c.h.b16 %v660
    %v1012 = vunpack.c.l.b16 %v661
    %v1013 = vunpack.c.h.b16 %v661
    %v1014 = vunpack.c.l.b16 %v662
    %v1015 = vunpack.c.h.b16 %v662
    %v1016 = vunpack.c.l.b16 %v663
    %v1017 = vunpack.c.h.b16 %v663
    %v1018 = vunpack.c.l.b16 %v664
    %v1019 = vunpack.c.h.b16 %v664
    %v1020 = vunpack.c.l.b16 %v665
    %v1021 = vunpack.c.h.b16 %v665
    %v1022 = vunpack.c.l.b16 %v666
    %v1023 = vunpack.c.h.b16 %v666
    %v1024 = vunpack.c.l.b16 %v667
    %v1025 = vunpack.c.h.b16 %v667
    %v1026 = vunpack.c.l.b16 %v668
    %v1027 = vunpack.c.h.b16 %v668
    %v1028 = vunpack.c.l.b16 %v669
    %v1029 = vunpack.c.h.b16 %v669
    %v1030 = vunpack.c.l.b16 %v670
    %v1031 = vunpack.c.h.b16 %v670
    %v1032 = vunpack.c.l.b16 %v671
    %v1033 = vunpack.c.h.b16 %v671
    %v1034 = vunpack.c.l.b16 %v672
    %v1035 = vunpack.c.h.b16 %v672
    %v1036 = vunpack.c.l.b16 %v673
    %v1037 = vunpack.c.h.b16 %v673
    %v1038 = vunpack.c.l.b16 %v674
    %v1039 = vunpack.c.h.b16 %v674
    %v1040 = vunpack.c.l.b16 %v675
    %v1041 = vunpack.c.h.b16 %v675
    %v1042 = vunpack.c.l.b16 %v676
    %v1043 = vunpack.c.h.b16 %v676
    %v1044 = vunpack.c.l.b16 %v677
    %v1045 = vunpack.c.h.b16 %v677
    %v1046 = vunpack.c.l.b16 %v678
    %v1047 = vunpack.c.h.b16 %v678
    %v1048 = vunpack.c.l.b16 %v679
    %v1049 = vunpack.c.h.b16 %v679
    %v1050 = vunpack.c.l.b16 %v680
    %v1051 = vunpack.c.h.b16 %v680
    %v1052 = vunpack.c.l.b16 %v681
    %v1053 = vunpack.c.h.b16 %v681
    %v1054 = vunpack.c.l.b16 %v682
    %v1055 = vunpack.c.h.b16 %v682
    %v1056 = vunpack.c.l.b16 %v683
    %v1057 = vunpack.c.h.b16 %v683
    %v1058 = vunpack.c.l.b16 %v684
    %v1059 = vunpack.c.h.b16 %v684
    %v1060 = vunpack.c.l.b16 %v685
    %v1061 = vunpack.c.h.b16 %v685
    %v1062 = vunpack.c.l.b16 %v686
    %v1063 = vunpack.c.h.b16 %v686
    %v1064 = vunpack.c.l.b16 %v687
    %v1065 = vunpack.c.h.b16 %v687
    %v1066 = vunpack.c.l.b16 %v688
    %v1067 = vunpack.c.h.b16 %v688
    %v1068 = vunpack.c.l.b16 %v689
    %v1069 = vunpack.c.h.b16 %v689
    %v1070 = vunpack.c.l.b16 %v690
    %v1071 = vunpack.c.h.b16 %v690
    %v1072 = vunpack.c.l.b16 %v691
    %v1073 = vunpack.c.h.b16 %v691
    %v1074 = vunpack.c.l.b16 %v692
    %v1075 = vunpack.c.h.b16 %v692
    %v1076 = vunpack.c.l.b16 %v693
    %v1077 = vunpack.c.h.b16 %v693
    %v1078 = vunpack.c.l.b16 %v694
    %v1079 = vunpack.c.h.b16 %v694
    %v1080 = vunpack.c.l.b16 %v695
    %v1081 = vunpack.c.h.b16 %v695
    %v1082 = vunpack.c.l.b16 %v696
    %v1083 = vunpack.c.h.b16 %v696
    %v1084 = vunpack.c.l.b16 %v697
    %v1085 = vunpack.c.h.b16 %v697
    %v1086 = vunpack.c.l.b16 %v698
    %v1087 = vunpack.c.h.b16 %v698
    %v1088 = vunpack.c.l.b16 %v699
    %v1089 = vunpack.c.h.b16 %v699
    %v1090 = vunpack.c.l.b16 %v700
    %v1091 = vunpack.c.h.b16 %v700
    %v1092 = vunpack.c.l.b16 %v701
    %v1093 = vunpack.c.h.b16 %v701
    %v1094 = vunpack.c.l.b16 %v702
    %v1095 = vunpack.c.h.b16 %v702
    %v1096 = vunpack.c.l.b16 %v703
    %v1097 = vunpack.c.h.b16 %v703
    %v1098 = vunpack.c.l.b16 %v704
    %v1099 = vunpack.c.h.b16 %v704
    %v1100 = vunpack.c.l.b16 %v705
    %v1101 = vunpack.c.h.b16 %v705
    %v1102 = vunpack.c.l.b16 %v706
    %v1103 = vunpack.c.h.b16 %v706
    %v1104 = vunpack.c.l.b16 %v707
    %v1105 = vunpack.c.h.b16 %v707
    %v1106 = vunpack.c.l.b16 %v708
    %v1107 = vunpack.c.h.b16 %v708
    %v1108 = vunpack.c.l.b16 %v709
    %v1109 = vunpack.c.h.b16 %v709
    %v1110 = vunpack.c.l.b16 %v710
    %v1111 = vunpack.c.h.b16 %v710
    %v1112 = vunpack.c.l.b16 %v711
    %v1113 = vunpack.c.h.b16 %v711
    %v1114 = vunpack.c.l.b16 %v712
    %v1115 = vunpack.c.h.b16 %v712
    %v1116 = vunpack.c.l.b16 %v713
    %v1117 = vunpack.c.h.b16 %v713
    %v1118 = vunpack.c.l.b16 %v714
    %v1119 = vunpack.c.h.b16 %v714
    %v1120 = vunpack.c.l.b16 %v715
    %v1121 = vunpack.c.h.b16 %v715
    %v1122 = vunpack.c.l.b16 %v716
    %v1123 = vunpack.c.h.b16 %v716
    %v1124 = vunpack.c.l.b16 %v717
    %v1125 = vunpack.c.h.b16 %v717
    %v1126 = vunpack.c.l.b16 %v718
    %v1127 = vunpack.c.h.b16 %v718
    %v1128 = vunpack.c.l.b16 %v719
    %v1129 = vunpack.c.h.b16 %v719
    %v1130 = vunpack.c.l.b16 %v720
    %v1131 = vunpack.c.h.b16 %v720
    %v1132 = vunpack.c.l.b16 %v721
    %v1133 = vunpack.c.h.b16 %v721
    %v1134 = vunpack.c.l.b16 %v722
    %v1135 = vunpack.c.h.b16 %v722
    %v1136 = vunpack.c.l.b16 %v723
    %v1137 = vunpack.c.h.b16 %v723
    %v1138 = vunpack.c.l.b16 %v724
    %v1139 = vunpack.c.h.b16 %v724
    %v1140 = vunpack.c.l.b16 %v725
    %v1141 = vunpack.c.h.b16 %v725
    %v1142 = vunpack.c.l.b16 %v726
    %v1143 = vunpack.c.h.b16 %v726
    %v1144 = vunpack.c.l.b16 %v727
    %v1145 = vunpack.c.h.b16 %v727
    %v1146 = vunpack.c.l.b16 %v728
    %v1147 = vunpack.c.h.b16 %v728
    %v1148 = vunpack.c.l.b16 %v729
    %v1149 = vunpack.c.h.b16 %v729
    %v1150 = vunpack.c.l.b16 %v730
    %v1151 = vunpack.c.h.b16 %v730
    %v1152 = vunpack.c.l.b16 %v731
    %v1153 = vunpack.c.h.b16 %v731
    %v1154 = vunpack.c.l.b16 %v732
    %v1155 = vunpack.c.h.b16 %v732
    %v1156 = vunpack.c.l.b16 %v733
    %v1157 = vunpack.c.h.b16 %v733
    %v1158 = vunpack.c.l.b16 %v734
    %v1159 = vunpack.c.h.b16 %v734
    %v1160 = vunpack.c.l.b16 %v735
    %v1161 = vunpack.c.h.b16 %v735
    %v1162 = vunpack.c.l.b16 %v736
    %v1163 = vunpack.c.h.b16 %v736
    %v1164 = vunpack.c.l.b16 %v737
    %v1165 = vunpack.c.h.b16 %v737
    %v1166 = vunpack.c.l.b16 %v738
    %v1167 = vunpack.c.h.b16 %v738
    %v1168 = vunpack.c.l.b16 %v739
    %v1169 = vunpack.c.h.b16 %v739
    %v1170 = vunpack.c.l.b16 %v740
    %v1171 = vunpack.c.h.b16 %v740
    %v1172 = vunpack.c.l.b16 %v741
    %v1173 = vunpack.c.h.b16 %v741
    %v1174 = vunpack.c.l.b16 %v742
    %v1175 = vunpack.c.h.b16 %v742
    %v1176 = vunpack.c.l.b16 %v743
    %v1177 = vunpack.c.h.b16 %v743
    %v1178 = vunpack.c.l.b16 %v744
    %v1179 = vunpack.c.h.b16 %v744
    %v1180 = vunpack.c.l.b16 %v745
    %v1181 = vunpack.c.h.b16 %v745
    %v1182 = vunpack.c.l.b16 %v746
    %v1183 = vunpack.c.h.b16 %v746
    %v1184 = vunpack.c.l.b16 %v747
    %v1185 = vunpack.c.h.b16 %v747
    %v1186 = vunpack.c.l.b16 %v748
    %v1187 = vunpack.c.h.b16 %v748
    %v1188 = vunpack.c.l.b16 %v749
    %v1189 = vunpack.c.h.b16 %v749
    %v1190 = vunpack.c.l.b16 %v750
    %v1191 = vunpack.c.h.b16 %v750
    %v1192 = vunpack.c.l.b16 %v751
    %v1193 = vunpack.c.h.b16 %v751
    %v1194 = vunpack.c.l.b16 %v752
    %v1195 = vunpack.c.h.b16 %v752
    %v1196 = vunpack.c.l.b16 %v753
    %v1197 = vunpack.c.h.b16 %v753
    %v1198 = vunpack.c.l.b16 %v754
    %v1199 = vunpack.c.h.b16 %v754
    %v1200 = vunpack.c.l.b16 %v755
    %v1201 = vunpack.c.h.b16 %v755
    %v1202 = vunpack.c.l.b16 %v756
    %v1203 = vunpack.c.h.b16 %v756
    %v1204 = vunpack.c.l.b16 %v757
    %v1205 = vunpack.c.h.b16 %v757
    %v1206 = vunpack.c.l.b16 %v758
    %v1207 = vunpack.c.h.b16 %v758
    %v1208 = vunpack.c.l.b16 %v759
    %v1209 = vunpack.c.h.b16 %v759
    %v1210 = vunpack.c.l.b16 %v760
    %v1211 = vunpack.c.h.b16 %v760
    %v1212 = vunpack.c.l.b16 %v761
    %v1213 = vunpack.c.h.b16 %v761
    %v1214 = vunpack.c.l.b16 %v762
    %v1215 = vunpack.c.h.b16 %v762
    %v1216 = vunpack.c.l.b16 %v763
    %v1217 = vunpack.c.h.b16 %v763
    %v1218 = vunpack.c.l.b16 %v764
    %v1219 = vunpack.c.h.b16 %v764
    %v1220 = vunpack.c.l.b16 %v765
    %v1221 = vunpack.c.h.b16 %v765
    %v1222 = vunpack.c.l.b16 %v766
    %v1223 = vunpack.c.h.b16 %v766
    %v1224 = vunpack.c.l.b16 %v767
    %v1225 = vunpack.c.h.b16 %v767
    %v1226 = vunpack.c.l.b16 %v768
    %v1227 = vunpack.c.h.b16 %v768
    %v1228 = vunpack.c.l.b16 %v769
    %v1229 = vunpack.c.h.b16 %v769
    %v1230 = vunpack.c.l.b16 %v770
    %v1231 = vunpack.c.h.b16 %v770
    %v1232 = vunpack.c.l.b16 %v771
    %v1233 = vunpack.c.h.b16 %v771
    %v1234 = vunpack.c.l.b16 %v772
    %v1235 = vunpack.c.h.b16 %v772
    %v1236 = vunpack.c.l.b16 %v773
    %v1237 = vunpack.c.h.b16 %v773
    %v1238 = vpack.c.b16 %v956, %v950
    %v1239 = vpack.c.b16 %v957, %v951
    %v1240 = vpack.c.b16 %v958, %v952
    %v1241 = vpack.c.b16 %v959, %v953
    %v1242 = vpack.c.b16 %v960, %v954
    %v1243 = vpack.c.b16 %v961, %v955
    %v1244 = vpack.c.b16 %v968, %v962
    %v1245 = vpack.c.b16 %v969, %v963
    %v1246 = vpack.c.b16 %v970, %v964
    %v1247 = vpack.c.b16 %v971, %v965
    %v1248 = vpack.c.b16 %v972, %v966
    %v1249 = vpack.c.b16 %v973, %v967
    %v1250 = vpack.c.b16 %v980, %v974
    %v1251 = vpack.c.b16 %v981, %v975
    %v1252 = vpack.c.b16 %v982, %v976
    %v1253 = vpack.c.b16 %v983, %v977
    %v1254 = vpack.c.b16 %v984, %v978
    %v1255 = vpack.c.b16 %v985, %v979
    %v1256 = vpack.c.b16 %v992, %v986
    %v1257 = vpack.c.b16 %v993, %v987
    %v1258 = vpack.c.b16 %v994, %v988
    %v1259 = vpack.c.b16 %v995, %v989
    %v1260 = vpack.c.b16 %v996, %v990
    %v1261 = vpack.c.b16 %v997, %v991
    %v1262 = vpack.c.b16 %v1004, %v998
    %v1263 = vpack.c.b16 %v1005, %v999
    %v1264 = vpack.c.b16 %v1006, %v1000
    %v1265 = vpack.c.b16 %v1007, %v1001
    %v1266 = vpack.c.b16 %v1008, %v1002
    %v1267 = vpack.c.b16 %v1009, %v1003
    %v1268 = vpack.c.b16 %v1016, %v1010
    %v1269 = vpack.c.b16 %v1017, %v1011
    %v1270 = vpack.c.b16 %v1018, %v1012
    %v1271 = vpack.c.b16 %v1019, %v1013
    %v1272 = vpack.c.b16 %v1020, %v1014
    %v1273 = vpack.c.b16 %v1021, %v1015
    %v1274 = vpack.c.b16 %v1028, %v1022
    %v1275 = vpack.c.b16 %v1029, %v1023
    %v1276 = vpack.c.b16 %v1030, %v1024
    %v1277 = vpack.c.b16 %v1031, %v1025
    %v1278 = vpack.c.b16 %v1032, %v1026
    %v1279 = vpack.c.b16 %v1033, %v1027
    %v1280 = vpack.c.b16 %v1040, %v1034
    %v1281 = vpack.c.b16 %v1041, %v1035
    %v1282 = vpack.c.b16 %v1042, %v1036
    %v1283 = vpack.c.b16 %v1043, %v1037
    %v1284 = vpack.c.b16 %v1044, %v1038
    %v1285 = vpack.c.b16 %v1045, %v1039
    %v1286 = vpack.c.b16 %v1052, %v1046
    %v1287 = vpack.c.b16 %v1053, %v1047
    %v1288 = vpack.c.b16 %v1054, %v1048
    %v1289 = vpack.c.b16 %v1055, %v1049
    %v1290 = vpack.c.b16 %v1056, %v1050
    %v1291 = vpack.c.b16 %v1057, %v1051
    %v1292 = vpack.c.b16 %v1064, %v1058
    %v1293 = vpack.c.b16 %v1065, %v1059
    %v1294 = vpack.c.b16 %v1066, %v1060
    %v1295 = vpack.c.b16 %v1067, %v1061
    %v1296 = vpack.c.b16 %v1068, %v1062
    %v1297 = vpack.c.b16 %v1069, %v1063
    %v1298 = vpack.c.b16 %v1076, %v1070
    %v1299 = vpack.c.b16 %v1077, %v1071
    %v1300 = vpack.c.b16 %v1078, %v1072
    %v1301 = vpack.c.b16 %v1079, %v1073
    %v1302 = vpack.c.b16 %v1080, %v1074
    %v1303 = vpack.c.b16 %v1081, %v1075
    %v1304 = vpack.c.b16 %v1088, %v1082
    %v1305 = vpack.c.b16 %v1089, %v1083
    %v1306 = vpack.c.b16 %v1090, %v1084
    %v1307 = vpack.c.b16 %v1091, %v1085
    %v1308 = vpack.c.b16 %v1092, %v1086
    %v1309 = vpack.c.b16 %v1093, %v1087
    %v1310 = vpack.c.b16 %v1100, %v1094
    %v1311 = vpack.c.b16 %v1101, %v1095
    %v1312 = vpack.c.b16 %v1102, %v1096
    %v1313 = vpack.c.b16 %v1103, %v1097
    %v1314 = vpack.c.b16 %v1104, %v1098
    %v1315 = vpack.c.b16 %v1105, %v1099
    %v1316 = vpack.c.b16 %v1112, %v1106
    %v1317 = vpack.c.b16 %v1113, %v1107
    %v1318 = vpack.c.b16 %v1114, %v1108
    %v1319 = vpack.c.b16 %v1115, %v1109
    %v1320 = vpack.c.b16 %v1116, %v1110
    %v1321 = vpack.c.b16 %v1117, %v1111
    %v1322 = vpack.c.b16 %v1124, %v1118
    %v1323 = vpack.c.b16 %v1125, %v1119
    %v1324 = vpack.c.b16 %v1126, %v1120
    %v1325 = vpack.c.b16 %v1127, %v1121
    %v1326 = vpack.c.b16 %v1128, %v1122
    %v1327 = vpack.c.b16 %v1129, %v1123
    %v1328 = vpack.c.b16 %v1136, %v1130
    %v1329 = vpack.c.b16 %v1137, %v1131
    %v1330 = vpack.c.b16 %v1138, %v1132
    %v1331 = vpack.c.b16 %v1139, %v1133
    %v1332 = vpack.c.b16 %v1140, %v1134
    %v1333 = vpack.c.b16 %v1141, %v1135
    %v1334 = vpack.c.b16 %v1148, %v1142
    %v1335 = vpack.c.b16 %v1149, %v1143
    %v1336 = vpack.c.b16 %v1150, %v1144
    %v1337 = vpack.c.b16 %v1151, %v1145
    %v1338 = vpack.c.b16 %v1152, %v1146
    %v1339 = vpack.c.b16 %v1153, %v1147
    %v1340 = vpack.c.b16 %v1160, %v1154
    %v1341 = vpack.c.b16 %v1161, %v1155
    %v1342 = vpack.c.b16 %v1162, %v1156
    %v1343 = vpack.c.b16 %v1163, %v1157
    %v1344 = vpack.c.b16 %v1164, %v1158
    %v1345 = vpack.c.b16 %v1165, %v1159
    %v1346 = vpack.c.b16 %v1172, %v1166
    %v1347 = vpack.c.b16 %v1173, %v1167
    %v1348 = vpack.c.b16 %v1174, %v1168
    %v1349 = vpack.c.b16 %v1175, %v1169
    %v1350 = vpack.c.b16 %v1176, %v1170
    %v1351 = vpack.c.b16 %v1177, %v1171
    %v1352 = vpack.c.b16 %v1184, %v1178
    %v1353 = vpack.c.b16 %v1185, %v1179
    %v1354 = vpack.c.b16 %v1186, %v1180
    %v1355 = vpack.c.b16 %v1187, %v1181
    %v1356 = vpack.c.b16 %v1188, %v1182
    %v1357 = vpack.c.b16 %v1189, %v1183
    %v1358 = vpack.c.b16 %v1196, %v1190
    %v1359 = vpack.c.b16 %v1197, %v1191
    %v1360 = vpack.c.b16 %v1198, %v1192
    %v1361 = vpack.c.b16 %v1199, %v1193
    %v1362 = vpack.c.b16 %v1200, %v1194
    %v1363 = vpack.c.b16 %v1201, %v1195
    %v1364 = vpack.c.b16 %v1208, %v1202
    %v1365 = vpack.c.b16 %v1209, %v1203
    %v1366 = vpack.c.b16 %v1210, %v1204
    %v1367 = vpack.c.b16 %v1211, %v1205
    %v1368 = vpack.c.b16 %v1212, %v1206
    %v1369 = vpack.c.b16 %v1213, %v1207
    %v1370 = vpack.c.b16 %v1220, %v1214
    %v1371 = vpack.c.b16 %v1221, %v1215
    %v1372 = vpack.c.b16 %v1222, %v1216
    %v1373 = vpack.c.b16 %v1223, %v1217
    %v1374 = vpack.c.b16 %v1224, %v1218
    %v1375 = vpack.c.b16 %v1225, %v1219
    %v1376 = vpack.c.b16 %v1232, %v1226
    %v1377 = vpack.c.b16 %v1233, %v1227
    %v1378 = vpack.c.b16 %v1234, %v1228
    %v1379 = vpack.c.b16 %v1235, %v1229
    %v1380 = vpack.c.b16 %v1236, %v1230
    %v1381 = vpack.c.b16 %v1237, %v1231
    %1526 = vmatprep.subr.bf16.mxu0 %v1239
    %1527 = vmatpush1.bf16.msra.mxu0 %v1238
    %1528 = vmatprep.subr.bf16.mxu0 %v1245
    %1529 = vmatpush1.bf16.msra.mxu0 %v1244
    %1530 = vmatprep.subr.bf16.mxu0 %v1251
    %1531 = vmatpush1.bf16.msra.mxu0 %v1250
    %1532 = vmatprep.subr.bf16.mxu0 %v1257
    %1533 = vmatpush1.bf16.msra.mxu0 %v1256
    %1534 = vmatprep.subr.bf16.mxu0 %v1263
    %1535 = vmatpush1.bf16.msra.mxu0 %v1262
    %1536 = vmatprep.subr.bf16.mxu0 %v1269
    %1537 = vmatpush1.bf16.msra.mxu0 %v1268
    %1538 = vmatprep.subr.bf16.mxu0 %v1275
    %1539 = vmatpush1.bf16.msra.mxu0 %v1274
    %1540 = vmatprep.subr.bf16.mxu0 %v1281
    %1541 = vmatpush1.bf16.msra.mxu0 %v1280
    %1542 = vmatprep.subr.bf16.mxu0 %v1287
    %1543 = vmatpush1.bf16.msra.mxu0 %v1286
    %1544 = vmatprep.subr.bf16.mxu0 %v1293
    %1545 = vmatpush1.bf16.msra.mxu0 %v1292
    %1546 = vmatprep.subr.bf16.mxu0 %v1299
    %1547 = vmatpush1.bf16.msra.mxu0 %v1298
    %1548 = vmatprep.subr.bf16.mxu0 %v1305
    %1549 = vmatpush1.bf16.msra.mxu0 %v1304
    %1550 = vmatprep.subr.bf16.mxu0 %v1311
    %1551 = vmatpush1.bf16.msra.mxu0 %v1310
    %1552 = vmatprep.subr.bf16.mxu0 %v1317
    %1553 = vmatpush1.bf16.msra.mxu0 %v1316
    %1554 = vmatprep.subr.bf16.mxu0 %v1323
    %1555 = vmatpush1.bf16.msra.mxu0 %v1322
    %1556 = vmatprep.subr.bf16.mxu0 %v1329
    %1557 = vmatpush1.bf16.msra.mxu0 %v1328
    %1558 = vmatprep.mubr.bf16.mxu0 %v628
    %1559 = vmatmul.mubr.bf16.gmra.mrb[0].mxu0 %v627
    %v1560 = vpop.f32.mrb[0].mxu0
    %v1561 = vadd.f32 %v779, %v1560
    %v1562 = vpop.f32.mrb[0].mxu0
    %v1563 = vadd.f32 %v783, %v1562
    %v1564 = vpop.f32.mrb[0].mxu0
    %v1565 = vadd.f32 %v779, %v1564
    %v1566 = vpop.f32.mrb[0].mxu0
    %v1567 = vadd.f32 %v783, %v1566
    %1568 = vdwg.mxu0
    %1569 = vmatprep.subr.bf16.mxu0 %v1335
    %1570 = vmatpush1.bf16.msra.mxu0 %v1334
    %1571 = vmatprep.subr.bf16.mxu0 %v1341
    %1572 = vmatpush1.bf16.msra.mxu0 %v1340
    %1573 = vmatprep.subr.bf16.mxu0 %v1347
    %1574 = vmatpush1.bf16.msra.mxu0 %v1346
    %1575 = vmatprep.subr.bf16.mxu0 %v1353
    %1576 = vmatpush1.bf16.msra.mxu0 %v1352
    %1577 = vmatprep.subr.bf16.mxu0 %v1359
    %1578 = vmatpush1.bf16.msra.mxu0 %v1358
    %1579 = vmatprep.subr.bf16.mxu0 %v1365
    %1580 = vmatpush1.bf16.msra.mxu0 %v1364
    %1581 = vmatprep.subr.bf16.mxu0 %v1371
    %1582 = vmatpush1.bf16.msra.mxu0 %v1370
    %1583 = vmatprep.subr.bf16.mxu0 %v1377
    %1584 = vmatpush1.bf16.msra.mxu0 %v1376
    %1585 = vmatprep.subr.bf16.mxu0 0
    %1586 = vmatpush1.bf16.msra.mxu0 0
    %1587 = vmatprep.subr.bf16.mxu0 0
    %1588 = vmatpush1.bf16.msra.mxu0 0
    %1589 = vmatprep.subr.bf16.mxu0 0
    %1590 = vmatpush1.bf16.msra.mxu0 0
    %1591 = vmatprep.subr.bf16.mxu0 0
    %1592 = vmatpush1.bf16.msra.mxu0 0
    %1593 = vmatprep.subr.bf16.mxu0 0
    %1594 = vmatpush1.bf16.msra.mxu0 0
    %1595 = vmatprep.subr.bf16.mxu0 0
    %1596 = vmatpush1.bf16.msra.mxu0 0
    %1597 = vmatprep.subr.bf16.mxu0 0
    %1598 = vmatpush1.bf16.msra.mxu0 0
    %1599 = vmatprep.subr.bf16.mxu0 0
    %1600 = vmatpush1.bf16.msra.mxu0 0
    %1601 = vmatprep.mubr.bf16.mxu0 0
    %1602 = vmatmul.mubr.bf16.gmra.mrb[0].mxu0 %v629
    %v1603 = vpop.f32.mrb[0].mxu0
    %v1604 = vadd.f32 %v1561, %v1603
    %v1605 = vpop.f32.mrb[0].mxu0
    %v1606 = vadd.f32 %v1563, %v1605
    %v1607 = vpop.f32.mrb[0].mxu0
    %v1608 = vadd.f32 %v1565, %v1607
    %v1609 = vpop.f32.mrb[0].mxu0
    %v1610 = vadd.f32 %v1567, %v1609
    %1611 = vdwg.mxu0
    %1612 = vmatprep.subr.bf16.mxu0 %v1241
    %1613 = vmatpush1.bf16.msra.mxu0 %v1240
    %1614 = vmatprep.subr.bf16.mxu0 %v1247
    %1615 = vmatpush1.bf16.msra.mxu0 %v1246
    %1616 = vmatprep.subr.bf16.mxu0 %v1253
    %1617 = vmatpush1.bf16.msra.mxu0 %v1252
    %1618 = vmatprep.subr.bf16.mxu0 %v1259
    %1619 = vmatpush1.bf16.msra.mxu0 %v1258
    %1620 = vmatprep.subr.bf16.mxu0 %v1265
    %1621 = vmatpush1.bf16.msra.mxu0 %v1264
    %1622 = vmatprep.subr.bf16.mxu0 %v1271
    %1623 = vmatpush1.bf16.msra.mxu0 %v1270
    %1624 = vmatprep.subr.bf16.mxu0 %v1277
    %1625 = vmatpush1.bf16.msra.mxu0 %v1276
    %1626 = vmatprep.subr.bf16.mxu0 %v1283
    %1627 = vmatpush1.bf16.msra.mxu0 %v1282
    %1628 = vmatprep.subr.bf16.mxu0 %v1289
    %1629 = vmatpush1.bf16.msra.mxu0 %v1288
    %1630 = vmatprep.subr.bf16.mxu0 %v1295
    %1631 = vmatpush1.bf16.msra.mxu0 %v1294
    %1632 = vmatprep.subr.bf16.mxu0 %v1301
    %1633 = vmatpush1.bf16.msra.mxu0 %v1300
    %1634 = vmatprep.subr.bf16.mxu0 %v1307
    %1635 = vmatpush1.bf16.msra.mxu0 %v1306
    %1636 = vmatprep.subr.bf16.mxu0 %v1313
    %1637 = vmatpush1.bf16.msra.mxu0 %v1312
    %1638 = vmatprep.subr.bf16.mxu0 %v1319
    %1639 = vmatpush1.bf16.msra.mxu0 %v1318
    %1640 = vmatprep.subr.bf16.mxu0 %v1325
    %1641 = vmatpush1.bf16.msra.mxu0 %v1324
    %1642 = vmatprep.subr.bf16.mxu0 %v1331
    %1643 = vmatpush1.bf16.msra.mxu0 %v1330
    %1644 = vmatprep.mubr.bf16.mxu0 %v628
    %1645 = vmatmul.mubr.bf16.gmra.mrb[0].mxu0 %v627
    %v1646 = vpop.f32.mrb[0].mxu0
    %v1647 = vadd.f32 %v787, %v1646
    %v1648 = vpop.f32.mrb[0].mxu0
    %v1649 = vadd.f32 %v791, %v1648
    %v1650 = vpop.f32.mrb[0].mxu0
    %v1651 = vadd.f32 %v787, %v1650
    %v1652 = vpop.f32.mrb[0].mxu0
    %v1653 = vadd.f32 %v791, %v1652
    %1654 = vdwg.mxu0
    %1655 = vmatprep.subr.bf16.mxu0 %v1337
    %1656 = vmatpush1.bf16.msra.mxu0 %v1336
    %1657 = vmatprep.subr.bf16.mxu0 %v1343
    %1658 = vmatpush1.bf16.msra.mxu0 %v1342
    %1659 = vmatprep.subr.bf16.mxu0 %v1349
    %1660 = vmatpush1.bf16.msra.mxu0 %v1348
    %1661 = vmatprep.subr.bf16.mxu0 %v1355
    %1662 = vmatpush1.bf16.msra.mxu0 %v1354
    %1663 = vmatprep.subr.bf16.mxu0 %v1361
    %1664 = vmatpush1.bf16.msra.mxu0 %v1360
    %1665 = vmatprep.subr.bf16.mxu0 %v1367
    %1666 = vmatpush1.bf16.msra.mxu0 %v1366
    %1667 = vmatprep.subr.bf16.mxu0 %v1373
    %1668 = vmatpush1.bf16.msra.mxu0 %v1372
    %1669 = vmatprep.subr.bf16.mxu0 %v1379
    %1670 = vmatpush1.bf16.msra.mxu0 %v1378
    %1671 = vmatprep.subr.bf16.mxu0 0
    %1672 = vmatpush1.bf16.msra.mxu0 0
    %1673 = vmatprep.subr.bf16.mxu0 0
    %1674 = vmatpush1.bf16.msra.mxu0 0
    %1675 = vmatprep.subr.bf16.mxu0 0
    %1676 = vmatpush1.bf16.msra.mxu0 0
    %1677 = vmatprep.subr.bf16.mxu0 0
    %1678 = vmatpush1.bf16.msra.mxu0 0
    %1679 = vmatprep.subr.bf16.mxu0 0
    %1680 = vmatpush1.bf16.msra.mxu0 0
    %1681 = vmatprep.subr.bf16.mxu0 0
    %1682 = vmatpush1.bf16.msra.mxu0 0
    %1683 = vmatprep.subr.bf16.mxu0 0
    %1684 = vmatpush1.bf16.msra.mxu0 0
    %1685 = vmatprep.subr.bf16.mxu0 0
    %1686 = vmatpush1.bf16.msra.mxu0 0
    %1687 = vmatprep.mubr.bf16.mxu0 0
    %1688 = vmatmul.mubr.bf16.gmra.mrb[0].mxu0 %v629
    %v1689 = vpop.f32.mrb[0].mxu0
    %v1690 = vadd.f32 %v1647, %v1689
    %v1691 = vpop.f32.mrb[0].mxu0
    %v1692 = vadd.f32 %v1649, %v1691
    %v1693 = vpop.f32.mrb[0].mxu0
    %v1694 = vadd.f32 %v1651, %v1693
    %v1695 = vpop.f32.mrb[0].mxu0
    %v1696 = vadd.f32 %v1653, %v1695
    %1697 = vdwg.mxu0
    %1698 = vmatprep.subr.bf16.mxu0 %v1243
    %1699 = vmatpush1.bf16.msra.mxu0 %v1242
    %1700 = vmatprep.subr.bf16.mxu0 %v1249
    %1701 = vmatpush1.bf16.msra.mxu0 %v1248
    %1702 = vmatprep.subr.bf16.mxu0 %v1255
    %1703 = vmatpush1.bf16.msra.mxu0 %v1254
    %1704 = vmatprep.subr.bf16.mxu0 %v1261
    %1705 = vmatpush1.bf16.msra.mxu0 %v1260
    %1706 = vmatprep.subr.bf16.mxu0 %v1267
    %1707 = vmatpush1.bf16.msra.mxu0 %v1266
    %1708 = vmatprep.subr.bf16.mxu0 %v1273
    %1709 = vmatpush1.bf16.msra.mxu0 %v1272
    %1710 = vmatprep.subr.bf16.mxu0 %v1279
    %1711 = vmatpush1.bf16.msra.mxu0 %v1278
    %1712 = vmatprep.subr.bf16.mxu0 %v1285
    %1713 = vmatpush1.bf16.msra.mxu0 %v1284
    %1714 = vmatprep.subr.bf16.mxu0 %v1291
    %1715 = vmatpush1.bf16.msra.mxu0 %v1290
    %1716 = vmatprep.subr.bf16.mxu0 %v1297
    %1717 = vmatpush1.bf16.msra.mxu0 %v1296
    %1718 = vmatprep.subr.bf16.mxu0 %v1303
    %1719 = vmatpush1.bf16.msra.mxu0 %v1302
    %1720 = vmatprep.subr.bf16.mxu0 %v1309
    %1721 = vmatpush1.bf16.msra.mxu0 %v1308
    %1722 = vmatprep.subr.bf16.mxu0 %v1315
    %1723 = vmatpush1.bf16.msra.mxu0 %v1314
    %1724 = vmatprep.subr.bf16.mxu0 %v1321
    %1725 = vmatpush1.bf16.msra.mxu0 %v1320
    %1726 = vmatprep.subr.bf16.mxu0 %v1327
    %1727 = vmatpush1.bf16.msra.mxu0 %v1326
    %1728 = vmatprep.subr.bf16.mxu0 %v1333
    %1729 = vmatpush1.bf16.msra.mxu0 %v1332
    %1730 = vmatprep.mubr.bf16.mxu0 %v628
    %1731 = vmatmul.mubr.bf16.gmra.mrb[0].mxu0 %v627
    %v1732 = vpop.f32.mrb[0].mxu0
    %v1733 = vadd.f32 %v795, %v1732
    %v1734 = vpop.f32.mrb[0].mxu0
    %v1735 = vadd.f32 %v799, %v1734
    %v1736 = vpop.f32.mrb[0].mxu0
    %v1737 = vadd.f32 %v795, %v1736
    %v1738 = vpop.f32.mrb[0].mxu0
    %v1739 = vadd.f32 %v799, %v1738
    %1740 = vdwg.mxu0
    %1741 = vmatprep.subr.bf16.mxu0 %v1339
    %1742 = vmatpush1.bf16.msra.mxu0 %v1338
    %1743 = vmatprep.subr.bf16.mxu0 %v1345
    %1744 = vmatpush1.bf16.msra.mxu0 %v1344
    %1745 = vmatprep.subr.bf16.mxu0 %v1351
    %1746 = vmatpush1.bf16.msra.mxu0 %v1350
    %1747 = vmatprep.subr.bf16.mxu0 %v1357
    %1748 = vmatpush1.bf16.msra.mxu0 %v1356
    %1749 = vmatprep.subr.bf16.mxu0 %v1363
    %1750 = vmatpush1.bf16.msra.mxu0 %v1362
    %1751 = vmatprep.subr.bf16.mxu0 %v1369
    %1752 = vmatpush1.bf16.msra.mxu0 %v1368
    %1753 = vmatprep.subr.bf16.mxu0 %v1375
    %1754 = vmatpush1.bf16.msra.mxu0 %v1374
    %1755 = vmatprep.subr.bf16.mxu0 %v1381
    %1756 = vmatpush1.bf16.msra.mxu0 %v1380
    %1757 = vmatprep.subr.bf16.mxu0 0
    %1758 = vmatpush1.bf16.msra.mxu0 0
    %1759 = vmatprep.subr.bf16.mxu0 0
    %1760 = vmatpush1.bf16.msra.mxu0 0
    %1761 = vmatprep.subr.bf16.mxu0 0
    %1762 = vmatpush1.bf16.msra.mxu0 0
    %1763 = vmatprep.subr.bf16.mxu0 0
    %1764 = vmatpush1.bf16.msra.mxu0 0
    %1765 = vmatprep.subr.bf16.mxu0 0
    %1766 = vmatpush1.bf16.msra.mxu0 0
    %1767 = vmatprep.subr.bf16.mxu0 0
    %1768 = vmatpush1.bf16.msra.mxu0 0
    %1769 = vmatprep.subr.bf16.mxu0 0
    %1770 = vmatpush1.bf16.msra.mxu0 0
    %1771 = vmatprep.subr.bf16.mxu0 0
    %1772 = vmatpush1.bf16.msra.mxu0 0
    %1773 = vmatprep.mubr.bf16.mxu0 0
    %1774 = vmatmul.mubr.bf16.gmra.mrb[0].mxu0 %v629
    %v1775 = vpop.f32.mrb[0].mxu0
    %v1776 = vadd.f32 %v1733, %v1775
    %v1777 = vpop.f32.mrb[0].mxu0
    %v1778 = vadd.f32 %v1735, %v1777
    %v1779 = vpop.f32.mrb[0].mxu0
    %v1780 = vadd.f32 %v1737, %v1779
    %v1781 = vpop.f32.mrb[0].mxu0
    %v1782 = vadd.f32 %v1739, %v1781
    %1783 = vdwg.mxu0
    %vm1784 = vcmp.ge.f32.partialorder %v1604, 0.0
    %vm1785 = vcmp.ge.f32.partialorder %v1606, 0.0
    %vm1786 = vcmp.ge.f32.partialorder %v1690, 0.0
    %vm1787 = vcmp.ge.f32.partialorder %v1608, 0.0
    %vm1788 = vcmp.ge.f32.partialorder %v1610, 0.0
    %vm1789 = vcmp.ge.f32.partialorder %v1694, 0.0
    %v1790 = vstv %s50
    %v1791 = vmul.f32 %v1790, %v1604
    %v1792 = vmul.f32 %v1790, %v1606
    %v1793 = vmul.f32 %v1790, %v1690
    %v1794 = vmul.f32 %v1790, %v1608
    %v1795 = vmul.f32 %v1790, %v1610
    %v1796 = vmul.f32 %v1790, %v1694
    %v1797 = vsel %vm1784, %v1604, %v1791
    %v1798 = vsel %vm1785, %v1606, %v1792
    %v1799 = vsel %vm1786, %v1690, %v1793
    %v1800 = vsel %vm1787, %v1608, %v1794
    %v1801 = vsel %vm1788, %v1610, %v1795
    %v1802 = vsel %vm1789, %v1694, %v1796
    %vm1803 = vcmp.ge.f32.partialorder %v1692, 0.0
    %vm1804 = vcmp.ge.f32.partialorder %v1776, 0.0
    %vm1805 = vcmp.ge.f32.partialorder %v1778, 0.0
    %vm1806 = vcmp.ge.f32.partialorder %v1696, 0.0
    %vm1807 = vcmp.ge.f32.partialorder %v1780, 0.0
    %vm1808 = vcmp.ge.f32.partialorder %v1782, 0.0
    %v1809 = vmul.f32 %v1790, %v1692
    %v1810 = vmul.f32 %v1790, %v1776
    %v1811 = vmul.f32 %v1790, %v1778
    %v1812 = vmul.f32 %v1790, %v1696
    %v1813 = vmul.f32 %v1790, %v1780
    %v1814 = vmul.f32 %v1790, %v1782
    %v1815 = vsel %vm1803, %v1692, %v1809
    %v1816 = vsel %vm1804, %v1776, %v1810
    %v1817 = vsel %vm1805, %v1778, %v1811
    %v1818 = vsel %vm1806, %v1696, %v1812
    %v1819 = vsel %vm1807, %v1780, %v1813
    %v1820 = vsel %vm1808, %v1782, %v1814
    %v1821 = vmax.f32 %v1797, %v1815
    %v1822 = vmax.f32 %v1798, %v1816
    %v1823 = vmax.f32 %v1799, %v1817
    %v1824 = vmax.f32 %v1800, %v1818
    %v1825 = vmax.f32 %v1801, %v1819
    %v1826 = vmax.f32 %v1802, %v1820
    %v1827 = vpack.c.bf16 %v1824, %v1821
    %v1828 = vpack.c.bf16 %v1825, %v1822
    %v1829 = vpack.c.bf16 %v1826, %v1823
    %v1830 = vld [vmem:[%s6] sm:$0xf]
    %v1831 = vld [vmem:[%s6 + $0x4] sm:$0xf]
    %v1832 = vld [vmem:[%s6 + $0x8] sm:$0xf]
    %v1833 = vld [vmem:[%s6 + $0xc] sm:$0xf]
    %v1834 = vld [vmem:[%s6 + $0x10] sm:$0xf]
    %v1835 = vld [vmem:[%s6 + $0x14] sm:$0xf]
    %v1836 = vld [vmem:[%s6 + $0x18] sm:$0xf]
    %v1837 = vld [vmem:[%s6 + $0x1c] sm:$0xf]
    %v1838 = vld [vmem:[%s6 + $0x20] sm:$0xf]
    %v1839 = vld [vmem:[%s6 + $0x24] sm:$0xf]
    %v1840 = vld [vmem:[%s6 + $0x28] sm:$0xf]
    %v1841 = vld [vmem:[%s6 + $0x2c] sm:$0xf]
    %v1842 = vld [vmem:[%s6 + $0x30] sm:$0xf]
    %v1843 = vld [vmem:[%s6 + $0x34] sm:$0xf]
    %v1844 = vld [vmem:[%s6 + $0x38] sm:$0xf]
    %v1845 = vld [vmem:[%s6 + $0x3c] sm:$0xf]
    %v1846 = vld [vmem:[%s6 + $0x40] sm:$0xf]
    %v1847 = vld [vmem:[%s6 + $0x44] sm:$0xf]
    %v1848 = vld [vmem:[%s6 + $0x48] sm:$0xf]
    %v1849 = vld [vmem:[%s6 + $0x4c] sm:$0xf]
    %v1850 = vld [vmem:[%s6 + $0x50] sm:$0xf]
    %v1851 = vld [vmem:[%s6 + $0x54] sm:$0xf]
    %v1852 = vld [vmem:[%s6 + $0x58] sm:$0xf]
    %v1853 = vld [vmem:[%s6 + $0x5c] sm:$0xf]
    %v1854 = vld [vmem:[%s6 + $0x60] sm:$0xf]
    %v1855 = vld [vmem:[%s6 + $0x64] sm:$0xf]
    %v1856 = vld [vmem:[%s6 + $0x68] sm:$0xf]
    %v1857 = vld [vmem:[%s6 + $0x6c] sm:$0xf]
    %v1858 = vld [vmem:[%s6 + $0x70] sm:$0xf]
    %v1859 = vld [vmem:[%s6 + $0x74] sm:$0xf]
    %v1860 = vld [vmem:[%s6 + $0x78] sm:$0xf]
    %v1861 = vld [vmem:[%s6 + $0x7c] sm:$0xf]
    %v1862 = vld [vmem:[%s6 + $0x80] sm:$0xf]
    %v1863 = vld [vmem:[%s6 + $0x84] sm:$0xf]
    %v1864 = vld [vmem:[%s6 + $0x88] sm:$0xf]
    %v1865 = vld [vmem:[%s6 + $0x8c] sm:$0xf]
    %v1866 = vld [vmem:[%s6 + $0x90] sm:$0xf]
    %v1867 = vld [vmem:[%s6 + $0x94] sm:$0xf]
    %v1868 = vld [vmem:[%s6 + $0x98] sm:$0xf]
    %v1869 = vld [vmem:[%s6 + $0x9c] sm:$0xf]
    %v1870 = vld [vmem:[%s6 + $0xa0] sm:$0xf]
    %v1871 = vld [vmem:[%s6 + $0xa4] sm:$0xf]
    %v1872 = vld [vmem:[%s6 + $0xa8] sm:$0xf]
    %v1873 = vld [vmem:[%s6 + $0xac] sm:$0xf]
    %v1874 = vld [vmem:[%s6 + $0xb0] sm:$0xf]
    %v1875 = vld [vmem:[%s6 + $0xb4] sm:$0xf]
    %v1876 = vld [vmem:[%s6 + $0xb8] sm:$0xf]
    %v1877 = vld [vmem:[%s6 + $0xbc] sm:$0xf]
    %v1878 = vld [vmem:[%s7] sm:$0x1]
    %v1880 = vlaneseq
    %v1881 = vshrl.u32 %v1880, 7
    %v1882 = vsub.s32 0, %v1881
    %v1883 = vrot.slane %v1878, %v1882
    %v1933 = vunpack.c.l.b16 %v1830
    %v1934 = vunpack.c.l.b16 %v1831
    %v1935 = vunpack.c.l.b16 %v1832
    %v1936 = vunpack.c.l.b16 %v1833
    %v1937 = vunpack.c.l.b16 %v1834
    %v1938 = vunpack.c.l.b16 %v1835
    %v1939 = vunpack.c.l.b16 %v1836
    %v1940 = vunpack.c.l.b16 %v1837
    %v1941 = vunpack.c.l.b16 %v1838
    %v1942 = vunpack.c.l.b16 %v1839
    %v1943 = vunpack.c.l.b16 %v1840
    %v1944 = vunpack.c.l.b16 %v1841
    %v1945 = vunpack.c.l.b16 %v1842
    %v1946 = vunpack.c.l.b16 %v1843
    %v1947 = vunpack.c.l.b16 %v1844
    %v1948 = vunpack.c.l.b16 %v1845
    %v1949 = vunpack.c.l.b16 %v1846
    %v1950 = vunpack.c.l.b16 %v1847
    %v1951 = vunpack.c.l.b16 %v1848
    %v1952 = vunpack.c.l.b16 %v1849
    %v1953 = vunpack.c.l.b16 %v1850
    %v1954 = vunpack.c.l.b16 %v1851
    %v1955 = vunpack.c.l.b16 %v1852
    %v1956 = vunpack.c.l.b16 %v1853
    %v1957 = vunpack.c.l.b16 %v1854
    %v1958 = vunpack.c.l.b16 %v1855
    %v1959 = vunpack.c.l.b16 %v1856
    %v1960 = vunpack.c.l.b16 %v1857
    %v1961 = vunpack.c.l.b16 %v1858
    %v1962 = vunpack.c.l.b16 %v1859
    %v1963 = vunpack.c.l.b16 %v1860
    %v1964 = vunpack.c.l.b16 %v1861
    %v1965 = vunpack.c.l.b16 %v1862
    %v1966 = vunpack.c.l.b16 %v1863
    %v1967 = vunpack.c.l.b16 %v1864
    %v1968 = vunpack.c.l.b16 %v1865
    %v1969 = vunpack.c.l.b16 %v1866
    %v1970 = vunpack.c.l.b16 %v1867
    %v1971 = vunpack.c.l.b16 %v1868
    %v1972 = vunpack.c.l.b16 %v1869
    %v1973 = vunpack.c.l.b16 %v1870
    %v1974 = vunpack.c.l.b16 %v1871
    %v1975 = vunpack.c.l.b16 %v1872
    %v1976 = vunpack.c.l.b16 %v1873
    %v1977 = vunpack.c.l.b16 %v1874
    %v1978 = vunpack.c.l.b16 %v1875
    %v1979 = vunpack.c.l.b16 %v1876
    %v1980 = vunpack.c.l.b16 %v1877
    %v1981 = vpack.c.b16 %v1934, %v1933
    %v1982 = vpack.c.b16 %v1936, %v1935
    %v1983 = vpack.c.b16 %v1938, %v1937
    %v1984 = vpack.c.b16 %v1940, %v1939
    %v1985 = vpack.c.b16 %v1942, %v1941
    %v1986 = vpack.c.b16 %v1944, %v1943
    %v1987 = vpack.c.b16 %v1946, %v1945
    %v1988 = vpack.c.b16 %v1948, %v1947
    %v1989 = vpack.c.b16 %v1950, %v1949
    %v1990 = vpack.c.b16 %v1952, %v1951
    %v1991 = vpack.c.b16 %v1954, %v1953
    %v1992 = vpack.c.b16 %v1956, %v1955
    %v1993 = vpack.c.b16 %v1958, %v1957
    %v1994 = vpack.c.b16 %v1960, %v1959
    %v1995 = vpack.c.b16 %v1962, %v1961
    %v1996 = vpack.c.b16 %v1964, %v1963
    %v1997 = vpack.c.b16 %v1966, %v1965
    %v1998 = vpack.c.b16 %v1968, %v1967
    %v1999 = vpack.c.b16 %v1970, %v1969
    %v2000 = vpack.c.b16 %v1972, %v1971
    %v2001 = vpack.c.b16 %v1974, %v1973
    %v2002 = vpack.c.b16 %v1976, %v1975
    %v2003 = vpack.c.b16 %v1978, %v1977
    %v2004 = vpack.c.b16 %v1980, %v1979
    %2029 = vmatprep.subr.bf16.mxu0 0
    %2030 = vmatpush1.bf16.msra.mxu0 %v1981
    %2031 = vmatprep.subr.bf16.mxu0 0
    %2032 = vmatpush1.bf16.msra.mxu0 %v1982
    %2033 = vmatprep.subr.bf16.mxu0 0
    %2034 = vmatpush1.bf16.msra.mxu0 %v1983
    %2035 = vmatprep.subr.bf16.mxu0 0
    %2036 = vmatpush1.bf16.msra.mxu0 %v1984
    %2037 = vmatprep.subr.bf16.mxu0 0
    %2038 = vmatpush1.bf16.msra.mxu0 %v1985
    %2039 = vmatprep.subr.bf16.mxu0 0
    %2040 = vmatpush1.bf16.msra.mxu0 %v1986
    %2041 = vmatprep.subr.bf16.mxu0 0
    %2042 = vmatpush1.bf16.msra.mxu0 %v1987
    %2043 = vmatprep.subr.bf16.mxu0 0
    %2044 = vmatpush1.bf16.msra.mxu0 %v1988
    %2045 = vmatprep.subr.bf16.mxu0 0
    %2046 = vmatpush1.bf16.msra.mxu0 %v1989
    %2047 = vmatprep.subr.bf16.mxu0 0
    %2048 = vmatpush1.bf16.msra.mxu0 %v1990
    %2049 = vmatprep.subr.bf16.mxu0 0
    %2050 = vmatpush1.bf16.msra.mxu0 %v1991
    %2051 = vmatprep.subr.bf16.mxu0 0
    %2052 = vmatpush1.bf16.msra.mxu0 %v1992
    %2053 = vmatprep.subr.bf16.mxu0 0
    %2054 = vmatpush1.bf16.msra.mxu0 %v1993
    %2055 = vmatprep.subr.bf16.mxu0 0
    %2056 = vmatpush1.bf16.msra.mxu0 %v1994
    %2057 = vmatprep.subr.bf16.mxu0 0
    %2058 = vmatpush1.bf16.msra.mxu0 %v1995
    %2059 = vmatprep.subr.bf16.mxu0 0
    %2060 = vmatpush1.bf16.msra.mxu0 %v1996
    %2061 = vmatprep.mubr.bf16.mxu0 %v1828
    %2062 = vmatmul.mubr.bf16.gmra.mrb[0].mxu0 %v1827
    %v2063 = vpop.f32.mrb[0].mxu0
    %v2064 = vadd.f32 %v1883, %v2063
    %v2065 = vpop.f32.mrb[0].mxu0
    %v2066 = vpop.f32.mrb[0].mxu0
    %v2067 = vadd.f32 %v1883, %v2066
    %v2068 = vpop.f32.mrb[0].mxu0
    %2069 = vdwg.mxu0
    %2070 = vmatprep.subr.bf16.mxu0 0
    %2071 = vmatpush1.bf16.msra.mxu0 %v1997
    %2072 = vmatprep.subr.bf16.mxu0 0
    %2073 = vmatpush1.bf16.msra.mxu0 %v1998
    %2074 = vmatprep.subr.bf16.mxu0 0
    %2075 = vmatpush1.bf16.msra.mxu0 %v1999
    %2076 = vmatprep.subr.bf16.mxu0 0
    %2077 = vmatpush1.bf16.msra.mxu0 %v2000
    %2078 = vmatprep.subr.bf16.mxu0 0
    %2079 = vmatpush1.bf16.msra.mxu0 %v2001
    %2080 = vmatprep.subr.bf16.mxu0 0
    %2081 = vmatpush1.bf16.msra.mxu0 %v2002
    %2082 = vmatprep.subr.bf16.mxu0 0
    %2083 = vmatpush1.bf16.msra.mxu0 %v2003
    %2084 = vmatprep.subr.bf16.mxu0 0
    %2085 = vmatpush1.bf16.msra.mxu0 %v2004
    %2086 = vmatprep.subr.bf16.mxu0 0
    %2087 = vmatpush1.bf16.msra.mxu0 0
    %2088 = vmatprep.subr.bf16.mxu0 0
    %2089 = vmatpush1.bf16.msra.mxu0 0
    %2090 = vmatprep.subr.bf16.mxu0 0
    %2091 = vmatpush1.bf16.msra.mxu0 0
    %2092 = vmatprep.subr.bf16.mxu0 0
    %2093 = vmatpush1.bf16.msra.mxu0 0
    %2094 = vmatprep.subr.bf16.mxu0 0
    %2095 = vmatpush1.bf16.msra.mxu0 0
    %2096 = vmatprep.subr.bf16.mxu0 0
    %2097 = vmatpush1.bf16.msra.mxu0 0
    %2098 = vmatprep.subr.bf16.mxu0 0
    %2099 = vmatpush1.bf16.msra.mxu0 0
    %2100 = vmatprep.subr.bf16.mxu0 0
    %2101 = vmatpush1.bf16.msra.mxu0 0
    %2102 = vmatprep.mubr.bf16.mxu0 0
    %2103 = vmatmul.mubr.bf16.gmra.mrb[0].mxu0 %v1829
    %v2104 = vpop.f32.mrb[0].mxu0
    %v2105 = vadd.f32 %v2064, %v2104
    %v2106 = vpop.f32.mrb[0].mxu0
    %v2107 = vpop.f32.mrb[0].mxu0
    %v2108 = vadd.f32 %v2067, %v2107
    %v2109 = vpop.f32.mrb[0].mxu0
    %2110 = vdwg.mxu0
    %vm2111 = vcmp.ge.f32.partialorder %v2105, 0.0
    %vm2112 = vcmp.ge.f32.partialorder %v2108, 0.0
    %v2113 = vstv %s51
    %v2114 = vmul.f32 %v2113, %v2105
    %v2115 = vmul.f32 %v2113, %v2108
    %v2116 = vsel %vm2111, %v2105, %v2114
    %v2117 = vsel %vm2112, %v2108, %v2115
    %v2118 = vpack.c.bf16 %v2117, %v2116
    %v2119 = vld [vmem:[%s8] sm:$0xf]
    %v2120 = vld [vmem:[%s8 + $0x4] sm:$0xf]
    %v2121 = vld [vmem:[%s8 + $0x8] sm:$0xf]
    %v2122 = vld [vmem:[%s8 + $0xc] sm:$0xf]
    %v2123 = vld [vmem:[%s8 + $0x10] sm:$0xf]
    %v2124 = vld [vmem:[%s8 + $0x14] sm:$0xf]
    %v2125 = vld [vmem:[%s8 + $0x18] sm:$0xf]
    %v2126 = vld [vmem:[%s8 + $0x1c] sm:$0xf]
    %v2127 = vld [vmem:[%s8 + $0x20] sm:$0xf]
    %v2128 = vld [vmem:[%s8 + $0x24] sm:$0xf]
    %v2129 = vld [vmem:[%s8 + $0x28] sm:$0xf]
    %v2130 = vld [vmem:[%s8 + $0x2c] sm:$0xf]
    %v2131 = vld [vmem:[%s8 + $0x30] sm:$0xf]
    %v2132 = vld [vmem:[%s8 + $0x34] sm:$0xf]
    %v2133 = vld [vmem:[%s8 + $0x38] sm:$0xf]
    %v2134 = vld [vmem:[%s8 + $0x3c] sm:$0xf]
    %v2135 = vld [vmem:[%s9] sm:$0x1]
    %v2137 = vlaneseq
    %v2138 = vshrl.u32 %v2137, 7
    %v2139 = vsub.s32 0, %v2138
    %v2140 = vrot.slane %v2135, %v2139
    %v2158 = vunpack.c.l.b16 %v2119
    %v2159 = vunpack.c.l.b16 %v2120
    %v2160 = vunpack.c.l.b16 %v2121
    %v2161 = vunpack.c.l.b16 %v2122
    %v2162 = vunpack.c.l.b16 %v2123
    %v2163 = vunpack.c.l.b16 %v2124
    %v2164 = vunpack.c.l.b16 %v2125
    %v2165 = vunpack.c.l.b16 %v2126
    %v2166 = vunpack.c.l.b16 %v2127
    %v2167 = vunpack.c.l.b16 %v2128
    %v2168 = vunpack.c.l.b16 %v2129
    %v2169 = vunpack.c.l.b16 %v2130
    %v2170 = vunpack.c.l.b16 %v2131
    %v2171 = vunpack.c.l.b16 %v2132
    %v2172 = vunpack.c.l.b16 %v2133
    %v2173 = vunpack.c.l.b16 %v2134
    %v2174 = vpack.c.b16 %v2159, %v2158
    %v2175 = vpack.c.b16 %v2161, %v2160
    %v2176 = vpack.c.b16 %v2163, %v2162
    %v2177 = vpack.c.b16 %v2165, %v2164
    %v2178 = vpack.c.b16 %v2167, %v2166
    %v2179 = vpack.c.b16 %v2169, %v2168
    %v2180 = vpack.c.b16 %v2171, %v2170
    %v2181 = vpack.c.b16 %v2173, %v2172
    %2190 = vmatprep.subr.bf16.mxu0 0
    %2191 = vmatpush1.bf16.msra.mxu0 %v2174
    %2192 = vmatprep.subr.bf16.mxu0 0
    %2193 = vmatpush1.bf16.msra.mxu0 %v2175
    %2194 = vmatprep.subr.bf16.mxu0 0
    %2195 = vmatpush1.bf16.msra.mxu0 %v2176
    %2196 = vmatprep.subr.bf16.mxu0 0
    %2197 = vmatpush1.bf16.msra.mxu0 %v2177
    %2198 = vmatprep.subr.bf16.mxu0 0
    %2199 = vmatpush1.bf16.msra.mxu0 %v2178
    %2200 = vmatprep.subr.bf16.mxu0 0
    %2201 = vmatpush1.bf16.msra.mxu0 %v2179
    %2202 = vmatprep.subr.bf16.mxu0 0
    %2203 = vmatpush1.bf16.msra.mxu0 %v2180
    %2204 = vmatprep.subr.bf16.mxu0 0
    %2205 = vmatpush1.bf16.msra.mxu0 %v2181
    %2206 = vmatprep.subr.bf16.mxu0 0
    %2207 = vmatpush1.bf16.msra.mxu0 0
    %2208 = vmatprep.subr.bf16.mxu0 0
    %2209 = vmatpush1.bf16.msra.mxu0 0
    %2210 = vmatprep.subr.bf16.mxu0 0
    %2211 = vmatpush1.bf16.msra.mxu0 0
    %2212 = vmatprep.subr.bf16.mxu0 0
    %2213 = vmatpush1.bf16.msra.mxu0 0
    %2214 = vmatprep.subr.bf16.mxu0 0
    %2215 = vmatpush1.bf16.msra.mxu0 0
    %2216 = vmatprep.subr.bf16.mxu0 0
    %2217 = vmatpush1.bf16.msra.mxu0 0
    %2218 = vmatprep.subr.bf16.mxu0 0
    %2219 = vmatpush1.bf16.msra.mxu0 0
    %2220 = vmatprep.subr.bf16.mxu0 0
    %2221 = vmatpush1.bf16.msra.mxu0 0
    %2222 = vmatprep.mubr.bf16.mxu0 0
    %2223 = vmatmul.mubr.bf16.gmra.mrb[0].mxu0 %v2118
    %v2224 = vpop.f32.mrb[0].mxu0
    %v2225 = vadd.f32 %v2140, %v2224
    %v2226 = vpop.f32.mrb[0].mxu0
    %v2227 = vpop.f32.mrb[0].mxu0
    %v2228 = vadd.f32 %v2140, %v2227
    %v2229 = vpop.f32.mrb[0].mxu0
    %2230 = vdwg.mxu0
    %vm2231 = vcmask 15360
    %2232 = vst.msk [vmem:[%s10] sm:$0xff] %vm2231, %v2225
    %2233 = vst.msk [vmem:[%s10 + $0x8] sm:$0xff] %vm2231, %v2228
    // Predicated region
    $region46: #{embedding1d_forward.1} parent=1 // pred_check
      _
    $region47: #{embedding1d_forward.1} parent=1 // pred_check_branch
      %2235 = sbr.rel (0) target = $region49
    $region48: #{embedding1d_forward.1} parent=1 // pred_region
      _
    $region49: #{embedding1d_forward.1} parent=1 // pred_fallthru
      _
    // Predicated region
    $region50: #{embedding1d_forward.1} parent=1 // pred_check
      _
    $region51: #{embedding1d_forward.1} parent=1 // pred_check_branch
      %2237 = sbr.rel (0) target = $region53
    $region52: #{embedding1d_forward.1} parent=1 // pred_region
      _
    $region53: #{embedding1d_forward.1} parent=1 // pred_fallthru
      _
    %2238 = vsyncpa [#allocation3], 1

</llo_original>
